<compile_context>
chip_gen: v6e
topology: v6e:2x2x1
jax: 0.10.0
libtpu: 0.0.40
codegen_flags: <defaults>
</compile_context>

<pallas_src>
import functools
import jax
import jax.numpy as jnp
from jax.experimental import pallas as pl
from jax.experimental.pallas import tpu as pltpu

_HI = jax.lax.Precision.HIGHEST


def _meta_conv_kernel(w_ref, x_ref, out_ref, *, in_channels, out_channels,
                      kernel_size, t_out):
    """Grouped dilated 1xK conv for one block of GB groups (groups on lanes).

    w_ref  : (C_in*K*C_out + C_out, GB)  per-group generated weights; row (i*K+k)*C_out + o
             is the conv tap (i, k, o), the trailing C_out rows are the per-group bias.
    x_ref  : (C_in*K, T_out, GB)         im2col'd input taps (tap (i, k) at row i*K + k).
    out_ref: (C_out, T_out, GB)
    """
    gb = out_ref.shape[-1]
    ck = in_channels * kernel_size
    cko = ck * out_channels

    bias = w_ref[cko:cko + out_channels, :]                                  # (C_out, GB)
    acc = jnp.broadcast_to(bias[:, None, :], (out_channels, t_out, gb))

    # C_in*K taps, each a full-width (C_out, T_out, 128-lane) VPU FMA.  The (C_out, GB)
    # weight slab and the (T_out, GB) tap are read from VMEM refs inside the loop, so the
    # only long-lived value is the small accumulator (no growing temporaries / spills).
    # TODO(synk): for configs where C_out*ceil(T_out/8) approaches the 64-vreg file, switch
    # to a per-output-channel streaming accumulator.
    for ik in range(ck):
        w_ik = w_ref[ik * out_channels:(ik + 1) * out_channels, :]           # (C_out, GB)
        x_ik = x_ref[ik]                                                     # (T_out, GB)
        acc = acc + w_ik[:, None, :] * x_ik[None, :, :]

    out_ref[...] = acc                                                       # lane-dense store


def _round_up(v, m):
    return (v + m - 1) // m * m


def _choose_group_block(G, per_group_bytes):
    """Groups per grid step (the lane axis): a multiple of 128 (full vreg lanes), sized so
    one in+out block copy stays under ~24 MiB (x2 double-buffering ~= 48 MiB < v7x's
    64 MiB/TC), capped at 2048 so very large G still pipelines over several steps.  No
    forced split for small/medium G (single-TC v5e/v6e would only pay per-step overhead)."""
    budget = 24 * 1024 * 1024
    gb = (budget // max(1, per_group_bytes)) // 128 * 128
    gb = int(max(128, min(gb, 2048)))
    return min(gb, _round_up(G, 128))


def meta_conv2d_update(meta_knowledge, x, params, *, kernel_size=3, dilation=1,
                       group_block=None):
    """meta_knowledge: (B, N, D) f32; x: (B, C_in, N, T) f32 (NCHW: H=nodes, W=time).
    Returns (B, C_out, N, T_out) f32 with T_out = T - dilation*(K-1), matching PyTorch."""
    W1, b1, W2, b2, Wb, bb = params        # W1:(D, C_in*D)  W2:(D, C_out*K)  Wb:(D, C_out)
    B, C_in, N, T = x.shape
    Bm, Nm, D = meta_knowledge.shape
    assert (Bm, Nm) == (B, N)
    C_out = Wb.shape[1]
    K = kernel_size
    T_out = T - dilation * (K - 1)
    if T_out <= 0:
        raise ValueError(f"seq_len {T} too short for kernel_size {K} and dilation {dilation}")
    G = B * N
    CK = C_in * K
    CKO = CK * C_out
    R = CKO + C_out
    f32 = jnp.float32

    # ---- algebraic fusion of the hyper-network (once per call, plain XLA) ----
    # Conv weight for group g:  W[g,o,i,k] = mk[g] . Wf[(i*K+k)*C_out+o] + bf[...], so the
    # two hyper linears collapse into one (R, D) weight; Wb/bb are appended as bias rows.
    W1r = W1.astype(f32).reshape(D, C_in, D)                     # [d, i, d']
    W2r = W2.astype(f32).reshape(D, C_out, K)                    # [d', o, k]
    Wf_conv = jnp.einsum('dip,pok->ikod', W1r, W2r, precision=_HI).reshape(CKO, D)
    bf_conv = jnp.einsum('ip,pok->iko', b1.astype(f32).reshape(C_in, D), W2r,
                         precision=_HI).reshape(CKO)
    bf_conv = bf_conv + jnp.tile(b2.astype(f32).reshape(C_out, K).T.reshape(K * C_out), C_in)
    Wf = jnp.concatenate([Wf_conv, Wb.astype(f32).T], axis=0)    # (R, D)
    bf = jnp.concatenate([bf_conv, bb.astype(f32)], axis=0)      # (R,)

    # Single hyper-net matmul for ALL groups, hoisted to XLA (the D contraction badly
    # underfills the MXU per-block; here it is amortised once).  Result is group-minor.
    mk2 = meta_knowledge.astype(f32).reshape(G, D)
    wallT = jnp.dot(Wf, mk2.T, precision=_HI) + bf[:, None]      # (R, G)

    # ---- blocking over groups (the lane axis) ----
    per_group_bytes = 4 * (R + CK * T_out + C_out * T_out)
    if group_block is None:
        GB = _choose_group_block(G, per_group_bytes)
    else:
        GB = min(max(128, _round_up(group_block, 128)), _round_up(G, 128))
    num_blocks = pl.cdiv(G, GB)
    # v7x shards the ("parallel",) grid axis across two TensorCores: nudge an odd multi-step
    # count even (costs at most one tiny extra step on single-TC chips).
    if group_block is None and num_blocks > 1 and num_blocks % 2 == 1:
        gb_even = max(128, _round_up(pl.cdiv(G, num_blocks + 1), 128))
        if pl.cdiv(G, gb_even) % 2 == 0:
            GB, num_blocks = gb_even, pl.cdiv(G, gb_even)
    G_pad = num_blocks * GB

    # ---- group-minor relayout + im2col (wrapper-side layout plumbing) ----
    # x: (B, C_in, N, T) -> (C_in, T, G) with groups minor, then K taps pre-materialised so
    # the kernel never slices at non-8-aligned sublane offsets (k*dilation).
    xg = jnp.transpose(x.astype(f32), (1, 3, 0, 2)).reshape(C_in, T, G)
    x_taps = jnp.stack([xg[:, k * dilation:k * dilation + T_out, :] for k in range(K)],
                       axis=1).reshape(CK, T_out, G)
    if G_pad != G:
        wallT = jnp.pad(wallT, ((0, 0), (0, G_pad - G)))
        x_taps = jnp.pad(x_taps, ((0, 0), (0, 0), (0, G_pad - G)))

    # VMEM budget computed from the actual footprint (v7x has only 64 MiB/TC).
    block_bytes = GB * per_group_bytes
    vmem_limit = int(min(48 << 20, max(16 << 20, 3 * block_bytes + (2 << 20))))

    kernel = functools.partial(
        _meta_conv_kernel, in_channels=C_in, out_channels=C_out,
        kernel_size=K, t_out=T_out)

    out = pl.pallas_call(
        kernel,
        out_shape=jax.ShapeDtypeStruct((C_out, T_out, G_pad), f32),
        grid=(num_blocks,),
        in_specs=[
            pl.BlockSpec((R, GB), lambda g: (0, g)),              # generated weights + bias (group-minor)
            pl.BlockSpec((CK, T_out, GB), lambda g: (0, 0, g)),   # im2col'd input taps (group-minor)
        ],
        out_specs=pl.BlockSpec((C_out, T_out, GB), lambda g: (0, 0, g)),
        compiler_params=pltpu.CompilerParams(
            dimension_semantics=("parallel",),
            vmem_limit_bytes=vmem_limit),
    )(wallT, x_taps)

    # (C_out, T_out, G) -> (B, C_out, N, T_out)
    return out[:, :, :G].reshape(C_out, T_out, B, N).transpose(2, 0, 3, 1)


def reference(meta_knowledge, x, params, *, kernel_size=3, dilation=1):
    """Pure-JAX replica of the PyTorch forward (for verification)."""
    W1, b1, W2, b2, Wb, bb = params
    B, C_in, N, T = x.shape
    D = meta_knowledge.shape[-1]
    C_out = Wb.shape[1]
    K = kernel_size
    T_out = T - dilation * (K - 1)
    G = B * N

    mk2 = meta_knowledge.reshape(G, D)
    h = jnp.dot(mk2, W1, precision=_HI) + b1                      # (G, C_in*D)
    h = h.reshape(G, C_in, D)
    w = jnp.einsum('gid,de->gie', h, W2, precision=_HI) + b2      # (G, C_in, C_out*K)
    w = w.reshape(G, C_in, C_out, K).transpose(0, 2, 1, 3)        # (G, C_out, C_in, K)
    bias = jnp.dot(mk2, Wb, precision=_HI) + bb                   # (G, C_out)

    xg = jnp.transpose(x, (0, 2, 1, 3)).reshape(G, C_in, T)
    out = jnp.zeros((G, C_out, T_out), jnp.float32)
    for k in range(K):
        out = out + jnp.einsum('goi,git->got', w[..., k],
                               xg[:, :, k * dilation:k * dilation + T_out], precision=_HI)
    out = out + bias[:, :, None]
    return out.reshape(B, N, C_out, T_out).transpose(0, 2, 1, 3)


if __name__ == "__main__":
    B, N, T = 2, 8, 16
    D, C_in, C_out, K, dil = 8, 4, 8, 3, 2     # meta_dim, in_ch, out_ch, kernel, dilation

    key = jax.random.PRNGKey(0)
    ks = jax.random.split(key, 8)
    bound = 1.0 / (D ** 0.5)                   # nn.Linear-style uniform init (fan_in = meta_dim)
    W1 = jax.random.uniform(ks[0], (D, C_in * D), jnp.float32, -bound, bound)
    b1 = jax.random.uniform(ks[1], (C_in * D,), jnp.float32, -bound, bound)
    W2 = jax.random.uniform(ks[2], (D, C_out * K), jnp.float32, -bound, bound)
    b2 = jax.random.uniform(ks[3], (C_out * K,), jnp.float32, -bound, bound)
    Wb = jax.random.uniform(ks[4], (D, C_out), jnp.float32, -bound, bound)
    bb = jax.random.uniform(ks[5], (C_out,), jnp.float32, -bound, bound)
    params = (W1, b1, W2, b2, Wb, bb)

    meta_knowledge = jax.random.normal(ks[6], (B, N, D), jnp.float32)
    x = jax.random.normal(ks[7], (B, C_in, N, T), jnp.float32)   # NCHW: (batch, in_ch, nodes, time)

    out = meta_conv2d_update(meta_knowledge, x, params, kernel_size=K, dilation=dil)
    out = jax.block_until_ready(out)

    ref = reference(meta_knowledge, x, params, kernel_size=K, dilation=dil)
    assert out.shape == (B, C_out, N, T - dil * (K - 1)), out.shape
    max_err = float(jnp.max(jnp.abs(out - ref)))
    assert jnp.allclose(out, ref, rtol=1e-4, atol=1e-4), f"max abs err {max_err}"
    print("KERNEL_OK")
</pallas_src>

<mosaic_0001>
module attributes {stable_mosaic.version = 11 : i64} {
  func.func @_meta_conv_kernel(%arg0: i32, %arg1: memref<104x128xf32, #tpu.memory_space<vmem>>, %arg2: memref<12x12x128xf32, #tpu.memory_space<vmem>>, %arg3: memref<8x12x128xf32, #tpu.memory_space<vmem>>) attributes {dimension_semantics = [#tpu.dimension_semantics<parallel>], iteration_bounds = array<i64: 1>, scalar_prefetch = 0 : i64, scratch_operands = 0 : i64, tpu.core_type = #tpu.core_type<tc>, window_params = [{transform_indices = @transform_0, window_bounds = array<i64: 104, 128>}, {transform_indices = @transform_1, window_bounds = array<i64: 12, 12, 128>}, {transform_indices = @transform_2, window_bounds = array<i64: 8, 12, 128>}]} {
    %c96 = arith.constant 96 : index
    %c0 = arith.constant 0 : index
    %0 = vector.load %arg1[%c96, %c0] : memref<104x128xf32, #tpu.memory_space<vmem>>, vector<8x128xf32>
    %1 = vector.shape_cast %0 : vector<8x128xf32> to vector<8x1x128xf32>
    %2 = vector.shape_cast %1 : vector<8x1x128xf32> to vector<8x1x128xf32>
    %3 = vector.broadcast %2 : vector<8x1x128xf32> to vector<8x12x128xf32>
    %c0_0 = arith.constant 0 : index
    %c0_1 = arith.constant 0 : index
    %4 = vector.load %arg1[%c0_0, %c0_1] : memref<104x128xf32, #tpu.memory_space<vmem>>, vector<8x128xf32>
    %c0_2 = arith.constant 0 : index
    %c0_3 = arith.constant 0 : index
    %c0_4 = arith.constant 0 : index
    %5 = vector.load %arg2[%c0_2, %c0_3, %c0_4] : memref<12x12x128xf32, #tpu.memory_space<vmem>>, vector<1x12x128xf32>
    %6 = vector.shape_cast %5 : vector<1x12x128xf32> to vector<12x128xf32>
    %7 = vector.shape_cast %4 : vector<8x128xf32> to vector<8x1x128xf32>
    %8 = vector.shape_cast %6 : vector<12x128xf32> to vector<1x12x128xf32>
    %9 = vector.broadcast %7 : vector<8x1x128xf32> to vector<8x12x128xf32>
    %10 = vector.broadcast %8 : vector<1x12x128xf32> to vector<8x12x128xf32>
    %11 = arith.mulf %9, %10 : vector<8x12x128xf32>
    %12 = arith.addf %3, %11 : vector<8x12x128xf32>
    %c8 = arith.constant 8 : index
    %c0_5 = arith.constant 0 : index
    %13 = vector.load %arg1[%c8, %c0_5] : memref<104x128xf32, #tpu.memory_space<vmem>>, vector<8x128xf32>
    %c1 = arith.constant 1 : index
    %c0_6 = arith.constant 0 : index
    %c0_7 = arith.constant 0 : index
    %14 = vector.load %arg2[%c1, %c0_6, %c0_7] : memref<12x12x128xf32, #tpu.memory_space<vmem>>, vector<1x12x128xf32>
    %15 = vector.shape_cast %14 : vector<1x12x128xf32> to vector<12x128xf32>
    %16 = vector.shape_cast %13 : vector<8x128xf32> to vector<8x1x128xf32>
    %17 = vector.shape_cast %15 : vector<12x128xf32> to vector<1x12x128xf32>
    %18 = vector.broadcast %16 : vector<8x1x128xf32> to vector<8x12x128xf32>
    %19 = vector.broadcast %17 : vector<1x12x128xf32> to vector<8x12x128xf32>
    %20 = arith.mulf %18, %19 : vector<8x12x128xf32>
    %21 = arith.addf %12, %20 : vector<8x12x128xf32>
    %c16 = arith.constant 16 : index
    %c0_8 = arith.constant 0 : index
    %22 = vector.load %arg1[%c16, %c0_8] : memref<104x128xf32, #tpu.memory_space<vmem>>, vector<8x128xf32>
    %c2 = arith.constant 2 : index
    %c0_9 = arith.constant 0 : index
    %c0_10 = arith.constant 0 : index
    %23 = vector.load %arg2[%c2, %c0_9, %c0_10] : memref<12x12x128xf32, #tpu.memory_space<vmem>>, vector<1x12x128xf32>
    %24 = vector.shape_cast %23 : vector<1x12x128xf32> to vector<12x128xf32>
    %25 = vector.shape_cast %22 : vector<8x128xf32> to vector<8x1x128xf32>
    %26 = vector.shape_cast %24 : vector<12x128xf32> to vector<1x12x128xf32>
    %27 = vector.broadcast %25 : vector<8x1x128xf32> to vector<8x12x128xf32>
    %28 = vector.broadcast %26 : vector<1x12x128xf32> to vector<8x12x128xf32>
    %29 = arith.mulf %27, %28 : vector<8x12x128xf32>
    %30 = arith.addf %21, %29 : vector<8x12x128xf32>
    %c24 = arith.constant 24 : index
    %c0_11 = arith.constant 0 : index
    %31 = vector.load %arg1[%c24, %c0_11] : memref<104x128xf32, #tpu.memory_space<vmem>>, vector<8x128xf32>
    %c3 = arith.constant 3 : index
    %c0_12 = arith.constant 0 : index
    %c0_13 = arith.constant 0 : index
    %32 = vector.load %arg2[%c3, %c0_12, %c0_13] : memref<12x12x128xf32, #tpu.memory_space<vmem>>, vector<1x12x128xf32>
    %33 = vector.shape_cast %32 : vector<1x12x128xf32> to vector<12x128xf32>
    %34 = vector.shape_cast %31 : vector<8x128xf32> to vector<8x1x128xf32>
    %35 = vector.shape_cast %33 : vector<12x128xf32> to vector<1x12x128xf32>
    %36 = vector.broadcast %34 : vector<8x1x128xf32> to vector<8x12x128xf32>
    %37 = vector.broadcast %35 : vector<1x12x128xf32> to vector<8x12x128xf32>
    %38 = arith.mulf %36, %37 : vector<8x12x128xf32>
    %39 = arith.addf %30, %38 : vector<8x12x128xf32>
    %c32 = arith.constant 32 : index
    %c0_14 = arith.constant 0 : index
    %40 = vector.load %arg1[%c32, %c0_14] : memref<104x128xf32, #tpu.memory_space<vmem>>, vector<8x128xf32>
    %c4 = arith.constant 4 : index
    %c0_15 = arith.constant 0 : index
    %c0_16 = arith.constant 0 : index
    %41 = vector.load %arg2[%c4, %c0_15, %c0_16] : memref<12x12x128xf32, #tpu.memory_space<vmem>>, vector<1x12x128xf32>
    %42 = vector.shape_cast %41 : vector<1x12x128xf32> to vector<12x128xf32>
    %43 = vector.shape_cast %40 : vector<8x128xf32> to vector<8x1x128xf32>
    %44 = vector.shape_cast %42 : vector<12x128xf32> to vector<1x12x128xf32>
    %45 = vector.broadcast %43 : vector<8x1x128xf32> to vector<8x12x128xf32>
    %46 = vector.broadcast %44 : vector<1x12x128xf32> to vector<8x12x128xf32>
    %47 = arith.mulf %45, %46 : vector<8x12x128xf32>
    %48 = arith.addf %39, %47 : vector<8x12x128xf32>
    %c40 = arith.constant 40 : index
    %c0_17 = arith.constant 0 : index
    %49 = vector.load %arg1[%c40, %c0_17] : memref<104x128xf32, #tpu.memory_space<vmem>>, vector<8x128xf32>
    %c5 = arith.constant 5 : index
    %c0_18 = arith.constant 0 : index
    %c0_19 = arith.constant 0 : index
    %50 = vector.load %arg2[%c5, %c0_18, %c0_19] : memref<12x12x128xf32, #tpu.memory_space<vmem>>, vector<1x12x128xf32>
    %51 = vector.shape_cast %50 : vector<1x12x128xf32> to vector<12x128xf32>
    %52 = vector.shape_cast %49 : vector<8x128xf32> to vector<8x1x128xf32>
    %53 = vector.shape_cast %51 : vector<12x128xf32> to vector<1x12x128xf32>
    %54 = vector.broadcast %52 : vector<8x1x128xf32> to vector<8x12x128xf32>
    %55 = vector.broadcast %53 : vector<1x12x128xf32> to vector<8x12x128xf32>
    %56 = arith.mulf %54, %55 : vector<8x12x128xf32>
    %57 = arith.addf %48, %56 : vector<8x12x128xf32>
    %c48 = arith.constant 48 : index
    %c0_20 = arith.constant 0 : index
    %58 = vector.load %arg1[%c48, %c0_20] : memref<104x128xf32, #tpu.memory_space<vmem>>, vector<8x128xf32>
    %c6 = arith.constant 6 : index
    %c0_21 = arith.constant 0 : index
    %c0_22 = arith.constant 0 : index
    %59 = vector.load %arg2[%c6, %c0_21, %c0_22] : memref<12x12x128xf32, #tpu.memory_space<vmem>>, vector<1x12x128xf32>
    %60 = vector.shape_cast %59 : vector<1x12x128xf32> to vector<12x128xf32>
    %61 = vector.shape_cast %58 : vector<8x128xf32> to vector<8x1x128xf32>
    %62 = vector.shape_cast %60 : vector<12x128xf32> to vector<1x12x128xf32>
    %63 = vector.broadcast %61 : vector<8x1x128xf32> to vector<8x12x128xf32>
    %64 = vector.broadcast %62 : vector<1x12x128xf32> to vector<8x12x128xf32>
    %65 = arith.mulf %63, %64 : vector<8x12x128xf32>
    %66 = arith.addf %57, %65 : vector<8x12x128xf32>
    %c56 = arith.constant 56 : index
    %c0_23 = arith.constant 0 : index
    %67 = vector.load %arg1[%c56, %c0_23] : memref<104x128xf32, #tpu.memory_space<vmem>>, vector<8x128xf32>
    %c7 = arith.constant 7 : index
    %c0_24 = arith.constant 0 : index
    %c0_25 = arith.constant 0 : index
    %68 = vector.load %arg2[%c7, %c0_24, %c0_25] : memref<12x12x128xf32, #tpu.memory_space<vmem>>, vector<1x12x128xf32>
    %69 = vector.shape_cast %68 : vector<1x12x128xf32> to vector<12x128xf32>
    %70 = vector.shape_cast %67 : vector<8x128xf32> to vector<8x1x128xf32>
    %71 = vector.shape_cast %69 : vector<12x128xf32> to vector<1x12x128xf32>
    %72 = vector.broadcast %70 : vector<8x1x128xf32> to vector<8x12x128xf32>
    %73 = vector.broadcast %71 : vector<1x12x128xf32> to vector<8x12x128xf32>
    %74 = arith.mulf %72, %73 : vector<8x12x128xf32>
    %75 = arith.addf %66, %74 : vector<8x12x128xf32>
    %c64 = arith.constant 64 : index
    %c0_26 = arith.constant 0 : index
    %76 = vector.load %arg1[%c64, %c0_26] : memref<104x128xf32, #tpu.memory_space<vmem>>, vector<8x128xf32>
    %c8_27 = arith.constant 8 : index
    %c0_28 = arith.constant 0 : index
    %c0_29 = arith.constant 0 : index
    %77 = vector.load %arg2[%c8_27, %c0_28, %c0_29] : memref<12x12x128xf32, #tpu.memory_space<vmem>>, vector<1x12x128xf32>
    %78 = vector.shape_cast %77 : vector<1x12x128xf32> to vector<12x128xf32>
    %79 = vector.shape_cast %76 : vector<8x128xf32> to vector<8x1x128xf32>
    %80 = vector.shape_cast %78 : vector<12x128xf32> to vector<1x12x128xf32>
    %81 = vector.broadcast %79 : vector<8x1x128xf32> to vector<8x12x128xf32>
    %82 = vector.broadcast %80 : vector<1x12x128xf32> to vector<8x12x128xf32>
    %83 = arith.mulf %81, %82 : vector<8x12x128xf32>
    %84 = arith.addf %75, %83 : vector<8x12x128xf32>
    %c72 = arith.constant 72 : index
    %c0_30 = arith.constant 0 : index
    %85 = vector.load %arg1[%c72, %c0_30] : memref<104x128xf32, #tpu.memory_space<vmem>>, vector<8x128xf32>
    %c9 = arith.constant 9 : index
    %c0_31 = arith.constant 0 : index
    %c0_32 = arith.constant 0 : index
    %86 = vector.load %arg2[%c9, %c0_31, %c0_32] : memref<12x12x128xf32, #tpu.memory_space<vmem>>, vector<1x12x128xf32>
    %87 = vector.shape_cast %86 : vector<1x12x128xf32> to vector<12x128xf32>
    %88 = vector.shape_cast %85 : vector<8x128xf32> to vector<8x1x128xf32>
    %89 = vector.shape_cast %87 : vector<12x128xf32> to vector<1x12x128xf32>
    %90 = vector.broadcast %88 : vector<8x1x128xf32> to vector<8x12x128xf32>
    %91 = vector.broadcast %89 : vector<1x12x128xf32> to vector<8x12x128xf32>
    %92 = arith.mulf %90, %91 : vector<8x12x128xf32>
    %93 = arith.addf %84, %92 : vector<8x12x128xf32>
    %c80 = arith.constant 80 : index
    %c0_33 = arith.constant 0 : index
    %94 = vector.load %arg1[%c80, %c0_33] : memref<104x128xf32, #tpu.memory_space<vmem>>, vector<8x128xf32>
    %c10 = arith.constant 10 : index
    %c0_34 = arith.constant 0 : index
    %c0_35 = arith.constant 0 : index
    %95 = vector.load %arg2[%c10, %c0_34, %c0_35] : memref<12x12x128xf32, #tpu.memory_space<vmem>>, vector<1x12x128xf32>
    %96 = vector.shape_cast %95 : vector<1x12x128xf32> to vector<12x128xf32>
    %97 = vector.shape_cast %94 : vector<8x128xf32> to vector<8x1x128xf32>
    %98 = vector.shape_cast %96 : vector<12x128xf32> to vector<1x12x128xf32>
    %99 = vector.broadcast %97 : vector<8x1x128xf32> to vector<8x12x128xf32>
    %100 = vector.broadcast %98 : vector<1x12x128xf32> to vector<8x12x128xf32>
    %101 = arith.mulf %99, %100 : vector<8x12x128xf32>
    %102 = arith.addf %93, %101 : vector<8x12x128xf32>
    %c88 = arith.constant 88 : index
    %c0_36 = arith.constant 0 : index
    %103 = vector.load %arg1[%c88, %c0_36] : memref<104x128xf32, #tpu.memory_space<vmem>>, vector<8x128xf32>
    %c11 = arith.constant 11 : index
    %c0_37 = arith.constant 0 : index
    %c0_38 = arith.constant 0 : index
    %104 = vector.load %arg2[%c11, %c0_37, %c0_38] : memref<12x12x128xf32, #tpu.memory_space<vmem>>, vector<1x12x128xf32>
    %105 = vector.shape_cast %104 : vector<1x12x128xf32> to vector<12x128xf32>
    %106 = vector.shape_cast %103 : vector<8x128xf32> to vector<8x1x128xf32>
    %107 = vector.shape_cast %105 : vector<12x128xf32> to vector<1x12x128xf32>
    %108 = vector.broadcast %106 : vector<8x1x128xf32> to vector<8x12x128xf32>
    %109 = vector.broadcast %107 : vector<1x12x128xf32> to vector<8x12x128xf32>
    %110 = arith.mulf %108, %109 : vector<8x12x128xf32>
    %111 = arith.addf %102, %110 : vector<8x12x128xf32>
    %c0_39 = arith.constant 0 : index
    %c0_40 = arith.constant 0 : index
    %c0_41 = arith.constant 0 : index
    %112 = vector.load %arg3[%c0_39, %c0_40, %c0_41] : memref<8x12x128xf32, #tpu.memory_space<vmem>>, vector<8x12x128xf32>
    tpu.vector_store %arg3[%c0_39, %c0_40, %c0_41], %111 {strides = array<i32>} : memref<8x12x128xf32, #tpu.memory_space<vmem>>, vector<8x12x128xf32>,
    return
  }
  func.func @transform_0(%arg0: i32) -> (i32, i32) {
    %c0_i32 = arith.constant 0 : i32
    %c0_i32_0 = arith.constant 0 : i32
    return %c0_i32, %arg0 : i32, i32
  }
  func.func @transform_1(%arg0: i32) -> (i32, i32, i32) {
    %c0_i32 = arith.constant 0 : i32
    %c0_i32_0 = arith.constant 0 : i32
    %c0_i32_1 = arith.constant 0 : i32
    return %c0_i32, %c0_i32_0, %arg0 : i32, i32, i32
  }
  func.func @transform_2(%arg0: i32) -> (i32, i32, i32) {
    %c0_i32 = arith.constant 0 : i32
    %c0_i32_0 = arith.constant 0 : i32
    %c0_i32_1 = arith.constant 0 : i32
    return %c0_i32, %c0_i32_0, %arg0 : i32, i32, i32
  }
}

</mosaic_0001>

<llo_original>
// kernel: tpu_custom_call.1
$region0: #{tpu_custom_call.1}
  #allocation0 [shape = 'u32[]', space=smem, size = 0x4, offset = 0x4, fixed_abs, tag = 'smem constant byte address 0x4 - core index']
  #allocation1 [shape = 'u32[144,128]{1,0:T(1,128)}', space=vmem, size = 0x12000, scoped, tag = 'internal scratch']
  %s0 = inlined_call_operand.hbm [shape: f32[104,128], index: 0, kind: input, shape index: {}]
  %s1 = inlined_call_operand.hbm [shape: f32[12,12,128], index: 1, kind: input, shape index: {}]
  %s2 = inlined_call_operand.vmem [shape: f32[8,12,128], index: 2, kind: output, shape index: {}]
  %s3 = sld [smem:[#allocation0]]
  $region26: #{tpu_custom_call.1} parent=0
    _
  %s5 = ssub.s32 1, %s3
  %s6 = scalar_select 0, %s5, %s3
  $region1: #{tpu_custom_call.1} parent=0
    #allocation2 [shape = 'u8[53248]{0}', space=vmem, size = 0xd000, scoped, tag = 'input window, operand 0, single buffered']
    #allocation3 [shape = 's32[1]{0}', space=sflag, size = 0x4, scoped, tag = 'scoped memory for tpu_custom_call.1']
    #allocation4 [shape = 'u8[98304]{0}', space=vmem, size = 0x18000, scoped, tag = 'input window, operand 1, single buffered']
    #allocation5 [shape = 's32[1]{0}', space=sflag, size = 0x4, scoped, tag = 'scoped memory for tpu_custom_call.1']
    %7 = vsyncpa [#allocation3], 0
    %8 = vsyncpa [#allocation5], 0
    // Predicated region
    $region2: #{tpu_custom_call.1} parent=1 // pred_check
      _
    $region3: #{tpu_custom_call.1} parent=1 // pred_check_branch
      %10 = sbr.rel (0) target = $region5
    $region4: #{tpu_custom_call.1} parent=1 // pred_region
      %s12 = ssub.s32 1664, 1664
      %13 = vsyncadd [#allocation3], %s12
      %s14 = sshll.u32 [#allocation2], 4
      %s15 = int_to_ptr.vmem [resolvable:$true] %s14
      %20 = dma.hbm_to_vmem [thread:$0]  %s0, 1664, %s15, [#allocation3], 128, 128, 8
    $region5: #{tpu_custom_call.1} parent=1 // pred_fallthru
      _
    // Predicated region
    $region6: #{tpu_custom_call.1} parent=1 // pred_check
      _
    $region7: #{tpu_custom_call.1} parent=1 // pred_check_branch
      %22 = sbr.rel (0) target = $region9
    $region8: #{tpu_custom_call.1} parent=1 // pred_region
      %s24 = ssub.s32 3072, 3072
      %25 = vsyncadd [#allocation5], %s24
      %s26 = sshll.u32 [#allocation4], 4
      %s27 = int_to_ptr.vmem [resolvable:$true] %s26
      %32 = dma.hbm_to_vmem [thread:$0]  %s1, 3072, %s27, [#allocation5], 128, 128, 8
    $region9: #{tpu_custom_call.1} parent=1 // pred_fallthru
      _
    // Predicated region
    $region10: #{tpu_custom_call.1} parent=1 // pred_check
      _
    $region11: #{tpu_custom_call.1} parent=1 // pred_check_branch
      %34 = sbr.rel (0) target = $region13
    $region12: #{tpu_custom_call.1} parent=1 // pred_region
      %35 = dma.done [#allocation3], 1664
    $region13: #{tpu_custom_call.1} parent=1 // pred_fallthru
      _
    // Predicated region
    $region14: #{tpu_custom_call.1} parent=1 // pred_check
      _
    $region15: #{tpu_custom_call.1} parent=1 // pred_check_branch
      %37 = sbr.rel (0) target = $region17
    $region16: #{tpu_custom_call.1} parent=1 // pred_region
      %38 = dma.done [#allocation5], 3072
    $region17: #{tpu_custom_call.1} parent=1 // pred_fallthru
      _
    %v39 = vld [vmem:[#allocation2 + $0x60] sm:$0xff]
    %v41 = vcombine.high %v39, %v39
    %v43 = vunpack.c.l.s4 1966171168
    %v44 = vunpack.c.0.s8 %v43
    %v45 = vlaneseq
    %v46 = vshrl.u32 %v45, 7
    %v47 = vsub.s32 %v44, %v46
    %v48 = vrot.slane %v39, %v47
    %v50 = vunpack.c.l.s4 1966171168
    %v51 = vunpack.c.0.s8 %v50
    %v52 = vlaneseq
    %v53 = vshrl.u32 %v52, 7
    %v54 = vsub.s32 %v51, %v53
    %v55 = vrot.slane %v41, %v54
    %v56 = vcombine.high %v48, %v48
    %v57 = vcombine.high %v55, %v55
    %v59 = vunpack.c.l.s4 1966171168
    %v60 = vunpack.c.0.s8 %v59
    %v61 = vlaneseq
    %v62 = vshrl.u32 %v61, 7
    %v63 = vsub.s32 %v60, %v62
    %v64 = vrot.slane %v48, %v63
    %v66 = vunpack.c.l.s4 1966171168
    %v67 = vunpack.c.0.s8 %v66
    %v68 = vlaneseq
    %v69 = vshrl.u32 %v68, 7
    %v70 = vsub.s32 %v67, %v69
    %v71 = vrot.slane %v55, %v70
    %v73 = vunpack.c.l.s4 1966171168
    %v74 = vunpack.c.0.s8 %v73
    %v75 = vlaneseq
    %v76 = vshrl.u32 %v75, 7
    %v77 = vsub.s32 %v74, %v76
    %v78 = vrot.slane %v56, %v77
    %v80 = vunpack.c.l.s4 1966171168
    %v81 = vunpack.c.0.s8 %v80
    %v82 = vlaneseq
    %v83 = vshrl.u32 %v82, 7
    %v84 = vsub.s32 %v81, %v83
    %v85 = vrot.slane %v57, %v84
    %v86 = vcombine.high %v64, %v64
    %v87 = vcombine.high %v71, %v71
    %v88 = vcombine.high %v78, %v78
    %v89 = vcombine.high %v85, %v85
    %v90 = vlaneseq
    %v91 = vshrl.u32 %v90, 7
    %v92 = vsub.s32 0, %v91
    %v93 = vrot.slane %v64, %v92
    %v94 = vlaneseq
    %v95 = vshrl.u32 %v94, 7
    %v96 = vsub.s32 0, %v95
    %v97 = vrot.slane %v78, %v96
    %v98 = vlaneseq
    %v99 = vshrl.u32 %v98, 7
    %v100 = vsub.s32 0, %v99
    %v101 = vrot.slane %v86, %v100
    %v102 = vlaneseq
    %v103 = vshrl.u32 %v102, 7
    %v104 = vsub.s32 0, %v103
    %v105 = vrot.slane %v88, %v104
    %v106 = vlaneseq
    %v107 = vshrl.u32 %v106, 7
    %v108 = vsub.s32 0, %v107
    %v109 = vrot.slane %v71, %v108
    %v110 = vlaneseq
    %v111 = vshrl.u32 %v110, 7
    %v112 = vsub.s32 0, %v111
    %v113 = vrot.slane %v85, %v112
    %v114 = vlaneseq
    %v115 = vshrl.u32 %v114, 7
    %v116 = vsub.s32 0, %v115
    %v117 = vrot.slane %v87, %v116
    %v118 = vlaneseq
    %v119 = vshrl.u32 %v118, 7
    %v120 = vsub.s32 0, %v119
    %v121 = vrot.slane %v89, %v120
    %v130 = vld [vmem:[#allocation2] sm:$0xff]
    %v131 = vld [vmem:[#allocation4] sm:$0xff]
    %v132 = vld [vmem:[#allocation4 + $0x8] sm:$0xf]
    %v134 = vcombine.high %v130, %v130
    %v136 = vunpack.c.l.s4 1966171168
    %v137 = vunpack.c.0.s8 %v136
    %v138 = vlaneseq
    %v139 = vshrl.u32 %v138, 7
    %v140 = vsub.s32 %v137, %v139
    %v141 = vrot.slane %v130, %v140
    %v143 = vunpack.c.l.s4 1966171168
    %v144 = vunpack.c.0.s8 %v143
    %v145 = vlaneseq
    %v146 = vshrl.u32 %v145, 7
    %v147 = vsub.s32 %v144, %v146
    %v148 = vrot.slane %v134, %v147
    %v149 = vcombine.high %v141, %v141
    %v150 = vcombine.high %v148, %v148
    %v152 = vunpack.c.l.s4 1966171168
    %v153 = vunpack.c.0.s8 %v152
    %v154 = vlaneseq
    %v155 = vshrl.u32 %v154, 7
    %v156 = vsub.s32 %v153, %v155
    %v157 = vrot.slane %v141, %v156
    %v159 = vunpack.c.l.s4 1966171168
    %v160 = vunpack.c.0.s8 %v159
    %v161 = vlaneseq
    %v162 = vshrl.u32 %v161, 7
    %v163 = vsub.s32 %v160, %v162
    %v164 = vrot.slane %v148, %v163
    %v166 = vunpack.c.l.s4 1966171168
    %v167 = vunpack.c.0.s8 %v166
    %v168 = vlaneseq
    %v169 = vshrl.u32 %v168, 7
    %v170 = vsub.s32 %v167, %v169
    %v171 = vrot.slane %v149, %v170
    %v173 = vunpack.c.l.s4 1966171168
    %v174 = vunpack.c.0.s8 %v173
    %v175 = vlaneseq
    %v176 = vshrl.u32 %v175, 7
    %v177 = vsub.s32 %v174, %v176
    %v178 = vrot.slane %v150, %v177
    %v179 = vcombine.high %v157, %v157
    %v180 = vcombine.high %v164, %v164
    %v181 = vcombine.high %v171, %v171
    %v182 = vcombine.high %v178, %v178
    %v183 = vlaneseq
    %v184 = vshrl.u32 %v183, 7
    %v185 = vsub.s32 0, %v184
    %v186 = vrot.slane %v157, %v185
    %v187 = vlaneseq
    %v188 = vshrl.u32 %v187, 7
    %v189 = vsub.s32 0, %v188
    %v190 = vrot.slane %v171, %v189
    %v191 = vlaneseq
    %v192 = vshrl.u32 %v191, 7
    %v193 = vsub.s32 0, %v192
    %v194 = vrot.slane %v179, %v193
    %v195 = vlaneseq
    %v196 = vshrl.u32 %v195, 7
    %v197 = vsub.s32 0, %v196
    %v198 = vrot.slane %v181, %v197
    %v199 = vlaneseq
    %v200 = vshrl.u32 %v199, 7
    %v201 = vsub.s32 0, %v200
    %v202 = vrot.slane %v164, %v201
    %v203 = vlaneseq
    %v204 = vshrl.u32 %v203, 7
    %v205 = vsub.s32 0, %v204
    %v206 = vrot.slane %v178, %v205
    %v207 = vlaneseq
    %v208 = vshrl.u32 %v207, 7
    %v209 = vsub.s32 0, %v208
    %v210 = vrot.slane %v180, %v209
    %v211 = vlaneseq
    %v212 = vshrl.u32 %v211, 7
    %v213 = vsub.s32 0, %v212
    %v214 = vrot.slane %v182, %v213
    %v223 = vmul.f32 %v186, %v131
    %v224 = vmul.f32 %v186, %v132
    %v225 = vmul.f32 %v190, %v131
    %v226 = vmul.f32 %v190, %v132
    %v227 = vmul.f32 %v194, %v131
    %v228 = vmul.f32 %v194, %v132
    %v229 = vmul.f32 %v198, %v131
    %v230 = vmul.f32 %v198, %v132
    %v231 = vmul.f32 %v202, %v131
    %v232 = vmul.f32 %v202, %v132
    %v233 = vmul.f32 %v206, %v131
    %v234 = vmul.f32 %v206, %v132
    %v235 = vmul.f32 %v210, %v131
    %v236 = vmul.f32 %v210, %v132
    %v237 = vmul.f32 %v214, %v131
    %v238 = vmul.f32 %v214, %v132
    %v239 = vadd.f32 %v93, %v223
    %v240 = vadd.f32 %v93, %v224
    %v241 = vadd.f32 %v97, %v225
    %v242 = vadd.f32 %v97, %v226
    %v243 = vadd.f32 %v101, %v227
    %v244 = vadd.f32 %v101, %v228
    %v245 = vadd.f32 %v105, %v229
    %v246 = vadd.f32 %v105, %v230
    %v247 = vadd.f32 %v109, %v231
    %v248 = vadd.f32 %v109, %v232
    %v249 = vadd.f32 %v113, %v233
    %v250 = vadd.f32 %v113, %v234
    %v251 = vadd.f32 %v117, %v235
    %v252 = vadd.f32 %v117, %v236
    %v253 = vadd.f32 %v121, %v237
    %v254 = vadd.f32 %v121, %v238
    %v255 = vld [vmem:[#allocation2 + $0x8] sm:$0xff]
    %s256 = scalar_lea.vmem [#allocation4], 16
    %v257 = vld [vmem:[%s256] sm:$0xff]
    %v258 = vld [vmem:[%s256 + $0x8] sm:$0xf]
    %v260 = vcombine.high %v255, %v255
    %v262 = vunpack.c.l.s4 1966171168
    %v263 = vunpack.c.0.s8 %v262
    %v264 = vlaneseq
    %v265 = vshrl.u32 %v264, 7
    %v266 = vsub.s32 %v263, %v265
    %v267 = vrot.slane %v255, %v266
    %v269 = vunpack.c.l.s4 1966171168
    %v270 = vunpack.c.0.s8 %v269
    %v271 = vlaneseq
    %v272 = vshrl.u32 %v271, 7
    %v273 = vsub.s32 %v270, %v272
    %v274 = vrot.slane %v260, %v273
    %v275 = vcombine.high %v267, %v267
    %v276 = vcombine.high %v274, %v274
    %v278 = vunpack.c.l.s4 1966171168
    %v279 = vunpack.c.0.s8 %v278
    %v280 = vlaneseq
    %v281 = vshrl.u32 %v280, 7
    %v282 = vsub.s32 %v279, %v281
    %v283 = vrot.slane %v267, %v282
    %v285 = vunpack.c.l.s4 1966171168
    %v286 = vunpack.c.0.s8 %v285
    %v287 = vlaneseq
    %v288 = vshrl.u32 %v287, 7
    %v289 = vsub.s32 %v286, %v288
    %v290 = vrot.slane %v274, %v289
    %v292 = vunpack.c.l.s4 1966171168
    %v293 = vunpack.c.0.s8 %v292
    %v294 = vlaneseq
    %v295 = vshrl.u32 %v294, 7
    %v296 = vsub.s32 %v293, %v295
    %v297 = vrot.slane %v275, %v296
    %v299 = vunpack.c.l.s4 1966171168
    %v300 = vunpack.c.0.s8 %v299
    %v301 = vlaneseq
    %v302 = vshrl.u32 %v301, 7
    %v303 = vsub.s32 %v300, %v302
    %v304 = vrot.slane %v276, %v303
    %v305 = vcombine.high %v283, %v283
    %v306 = vcombine.high %v290, %v290
    %v307 = vcombine.high %v297, %v297
    %v308 = vcombine.high %v304, %v304
    %v309 = vlaneseq
    %v310 = vshrl.u32 %v309, 7
    %v311 = vsub.s32 0, %v310
    %v312 = vrot.slane %v283, %v311
    %v313 = vlaneseq
    %v314 = vshrl.u32 %v313, 7
    %v315 = vsub.s32 0, %v314
    %v316 = vrot.slane %v297, %v315
    %v317 = vlaneseq
    %v318 = vshrl.u32 %v317, 7
    %v319 = vsub.s32 0, %v318
    %v320 = vrot.slane %v305, %v319
    %v321 = vlaneseq
    %v322 = vshrl.u32 %v321, 7
    %v323 = vsub.s32 0, %v322
    %v324 = vrot.slane %v307, %v323
    %v325 = vlaneseq
    %v326 = vshrl.u32 %v325, 7
    %v327 = vsub.s32 0, %v326
    %v328 = vrot.slane %v290, %v327
    %v329 = vlaneseq
    %v330 = vshrl.u32 %v329, 7
    %v331 = vsub.s32 0, %v330
    %v332 = vrot.slane %v304, %v331
    %v333 = vlaneseq
    %v334 = vshrl.u32 %v333, 7
    %v335 = vsub.s32 0, %v334
    %v336 = vrot.slane %v306, %v335
    %v337 = vlaneseq
    %v338 = vshrl.u32 %v337, 7
    %v339 = vsub.s32 0, %v338
    %v340 = vrot.slane %v308, %v339
    %v349 = vmul.f32 %v312, %v257
    %v350 = vmul.f32 %v312, %v258
    %v351 = vmul.f32 %v316, %v257
    %v352 = vmul.f32 %v316, %v258
    %v353 = vmul.f32 %v320, %v257
    %v354 = vmul.f32 %v320, %v258
    %v355 = vmul.f32 %v324, %v257
    %v356 = vmul.f32 %v324, %v258
    %v357 = vmul.f32 %v328, %v257
    %v358 = vmul.f32 %v328, %v258
    %v359 = vmul.f32 %v332, %v257
    %v360 = vmul.f32 %v332, %v258
    %v361 = vmul.f32 %v336, %v257
    %v362 = vmul.f32 %v336, %v258
    %v363 = vmul.f32 %v340, %v257
    %v364 = vmul.f32 %v340, %v258
    %v365 = vadd.f32 %v239, %v349
    %v366 = vadd.f32 %v240, %v350
    %v367 = vadd.f32 %v241, %v351
    %v368 = vadd.f32 %v242, %v352
    %v369 = vadd.f32 %v243, %v353
    %v370 = vadd.f32 %v244, %v354
    %v371 = vadd.f32 %v245, %v355
    %v372 = vadd.f32 %v246, %v356
    %v373 = vadd.f32 %v247, %v357
    %v374 = vadd.f32 %v248, %v358
    %v375 = vadd.f32 %v249, %v359
    %v376 = vadd.f32 %v250, %v360
    %v377 = vadd.f32 %v251, %v361
    %v378 = vadd.f32 %v252, %v362
    %v379 = vadd.f32 %v253, %v363
    %v380 = vadd.f32 %v254, %v364
    %v381 = vld [vmem:[#allocation2 + $0x10] sm:$0xff]
    %s382 = scalar_lea.vmem [#allocation4], 32
    %v383 = vld [vmem:[%s382] sm:$0xff]
    %v384 = vld [vmem:[%s382 + $0x8] sm:$0xf]
    %v386 = vcombine.high %v381, %v381
    %v388 = vunpack.c.l.s4 1966171168
    %v389 = vunpack.c.0.s8 %v388
    %v390 = vlaneseq
    %v391 = vshrl.u32 %v390, 7
    %v392 = vsub.s32 %v389, %v391
    %v393 = vrot.slane %v381, %v392
    %v395 = vunpack.c.l.s4 1966171168
    %v396 = vunpack.c.0.s8 %v395
    %v397 = vlaneseq
    %v398 = vshrl.u32 %v397, 7
    %v399 = vsub.s32 %v396, %v398
    %v400 = vrot.slane %v386, %v399
    %v401 = vcombine.high %v393, %v393
    %v402 = vcombine.high %v400, %v400
    %v404 = vunpack.c.l.s4 1966171168
    %v405 = vunpack.c.0.s8 %v404
    %v406 = vlaneseq
    %v407 = vshrl.u32 %v406, 7
    %v408 = vsub.s32 %v405, %v407
    %v409 = vrot.slane %v393, %v408
    %v411 = vunpack.c.l.s4 1966171168
    %v412 = vunpack.c.0.s8 %v411
    %v413 = vlaneseq
    %v414 = vshrl.u32 %v413, 7
    %v415 = vsub.s32 %v412, %v414
    %v416 = vrot.slane %v400, %v415
    %v418 = vunpack.c.l.s4 1966171168
    %v419 = vunpack.c.0.s8 %v418
    %v420 = vlaneseq
    %v421 = vshrl.u32 %v420, 7
    %v422 = vsub.s32 %v419, %v421
    %v423 = vrot.slane %v401, %v422
    %v425 = vunpack.c.l.s4 1966171168
    %v426 = vunpack.c.0.s8 %v425
    %v427 = vlaneseq
    %v428 = vshrl.u32 %v427, 7
    %v429 = vsub.s32 %v426, %v428
    %v430 = vrot.slane %v402, %v429
    %v431 = vcombine.high %v409, %v409
    %v432 = vcombine.high %v416, %v416
    %v433 = vcombine.high %v423, %v423
    %v434 = vcombine.high %v430, %v430
    %v435 = vlaneseq
    %v436 = vshrl.u32 %v435, 7
    %v437 = vsub.s32 0, %v436
    %v438 = vrot.slane %v409, %v437
    %v439 = vlaneseq
    %v440 = vshrl.u32 %v439, 7
    %v441 = vsub.s32 0, %v440
    %v442 = vrot.slane %v423, %v441
    %v443 = vlaneseq
    %v444 = vshrl.u32 %v443, 7
    %v445 = vsub.s32 0, %v444
    %v446 = vrot.slane %v431, %v445
    %v447 = vlaneseq
    %v448 = vshrl.u32 %v447, 7
    %v449 = vsub.s32 0, %v448
    %v450 = vrot.slane %v433, %v449
    %v451 = vlaneseq
    %v452 = vshrl.u32 %v451, 7
    %v453 = vsub.s32 0, %v452
    %v454 = vrot.slane %v416, %v453
    %v455 = vlaneseq
    %v456 = vshrl.u32 %v455, 7
    %v457 = vsub.s32 0, %v456
    %v458 = vrot.slane %v430, %v457
    %v459 = vlaneseq
    %v460 = vshrl.u32 %v459, 7
    %v461 = vsub.s32 0, %v460
    %v462 = vrot.slane %v432, %v461
    %v463 = vlaneseq
    %v464 = vshrl.u32 %v463, 7
    %v465 = vsub.s32 0, %v464
    %v466 = vrot.slane %v434, %v465
    %v475 = vmul.f32 %v438, %v383
    %v476 = vmul.f32 %v438, %v384
    %v477 = vmul.f32 %v442, %v383
    %v478 = vmul.f32 %v442, %v384
    %v479 = vmul.f32 %v446, %v383
    %v480 = vmul.f32 %v446, %v384
    %v481 = vmul.f32 %v450, %v383
    %v482 = vmul.f32 %v450, %v384
    %v483 = vmul.f32 %v454, %v383
    %v484 = vmul.f32 %v454, %v384
    %v485 = vmul.f32 %v458, %v383
    %v486 = vmul.f32 %v458, %v384
    %v487 = vmul.f32 %v462, %v383
    %v488 = vmul.f32 %v462, %v384
    %v489 = vmul.f32 %v466, %v383
    %v490 = vmul.f32 %v466, %v384
    %v491 = vadd.f32 %v365, %v475
    %v492 = vadd.f32 %v366, %v476
    %v493 = vadd.f32 %v367, %v477
    %v494 = vadd.f32 %v368, %v478
    %v495 = vadd.f32 %v369, %v479
    %v496 = vadd.f32 %v370, %v480
    %v497 = vadd.f32 %v371, %v481
    %v498 = vadd.f32 %v372, %v482
    %v499 = vadd.f32 %v373, %v483
    %v500 = vadd.f32 %v374, %v484
    %v501 = vadd.f32 %v375, %v485
    %v502 = vadd.f32 %v376, %v486
    %v503 = vadd.f32 %v377, %v487
    %v504 = vadd.f32 %v378, %v488
    %v505 = vadd.f32 %v379, %v489
    %v506 = vadd.f32 %v380, %v490
    %v507 = vld [vmem:[#allocation2 + $0x18] sm:$0xff]
    %s508 = scalar_lea.vmem [#allocation4], 48
    %v509 = vld [vmem:[%s508] sm:$0xff]
    %v510 = vld [vmem:[%s508 + $0x8] sm:$0xf]
    %v512 = vcombine.high %v507, %v507
    %v514 = vunpack.c.l.s4 1966171168
    %v515 = vunpack.c.0.s8 %v514
    %v516 = vlaneseq
    %v517 = vshrl.u32 %v516, 7
    %v518 = vsub.s32 %v515, %v517
    %v519 = vrot.slane %v507, %v518
    %v521 = vunpack.c.l.s4 1966171168
    %v522 = vunpack.c.0.s8 %v521
    %v523 = vlaneseq
    %v524 = vshrl.u32 %v523, 7
    %v525 = vsub.s32 %v522, %v524
    %v526 = vrot.slane %v512, %v525
    %v527 = vcombine.high %v519, %v519
    %v528 = vcombine.high %v526, %v526
    %v530 = vunpack.c.l.s4 1966171168
    %v531 = vunpack.c.0.s8 %v530
    %v532 = vlaneseq
    %v533 = vshrl.u32 %v532, 7
    %v534 = vsub.s32 %v531, %v533
    %v535 = vrot.slane %v519, %v534
    %v537 = vunpack.c.l.s4 1966171168
    %v538 = vunpack.c.0.s8 %v537
    %v539 = vlaneseq
    %v540 = vshrl.u32 %v539, 7
    %v541 = vsub.s32 %v538, %v540
    %v542 = vrot.slane %v526, %v541
    %v544 = vunpack.c.l.s4 1966171168
    %v545 = vunpack.c.0.s8 %v544
    %v546 = vlaneseq
    %v547 = vshrl.u32 %v546, 7
    %v548 = vsub.s32 %v545, %v547
    %v549 = vrot.slane %v527, %v548
    %v551 = vunpack.c.l.s4 1966171168
    %v552 = vunpack.c.0.s8 %v551
    %v553 = vlaneseq
    %v554 = vshrl.u32 %v553, 7
    %v555 = vsub.s32 %v552, %v554
    %v556 = vrot.slane %v528, %v555
    %v557 = vcombine.high %v535, %v535
    %v558 = vcombine.high %v542, %v542
    %v559 = vcombine.high %v549, %v549
    %v560 = vcombine.high %v556, %v556
    %v561 = vlaneseq
    %v562 = vshrl.u32 %v561, 7
    %v563 = vsub.s32 0, %v562
    %v564 = vrot.slane %v535, %v563
    %v565 = vlaneseq
    %v566 = vshrl.u32 %v565, 7
    %v567 = vsub.s32 0, %v566
    %v568 = vrot.slane %v549, %v567
    %v569 = vlaneseq
    %v570 = vshrl.u32 %v569, 7
    %v571 = vsub.s32 0, %v570
    %v572 = vrot.slane %v557, %v571
    %v573 = vlaneseq
    %v574 = vshrl.u32 %v573, 7
    %v575 = vsub.s32 0, %v574
    %v576 = vrot.slane %v559, %v575
    %v577 = vlaneseq
    %v578 = vshrl.u32 %v577, 7
    %v579 = vsub.s32 0, %v578
    %v580 = vrot.slane %v542, %v579
    %v581 = vlaneseq
    %v582 = vshrl.u32 %v581, 7
    %v583 = vsub.s32 0, %v582
    %v584 = vrot.slane %v556, %v583
    %v585 = vlaneseq
    %v586 = vshrl.u32 %v585, 7
    %v587 = vsub.s32 0, %v586
    %v588 = vrot.slane %v558, %v587
    %v589 = vlaneseq
    %v590 = vshrl.u32 %v589, 7
    %v591 = vsub.s32 0, %v590
    %v592 = vrot.slane %v560, %v591
    %v601 = vmul.f32 %v564, %v509
    %v602 = vmul.f32 %v564, %v510
    %v603 = vmul.f32 %v568, %v509
    %v604 = vmul.f32 %v568, %v510
    %v605 = vmul.f32 %v572, %v509
    %v606 = vmul.f32 %v572, %v510
    %v607 = vmul.f32 %v576, %v509
    %v608 = vmul.f32 %v576, %v510
    %v609 = vmul.f32 %v580, %v509
    %v610 = vmul.f32 %v580, %v510
    %v611 = vmul.f32 %v584, %v509
    %v612 = vmul.f32 %v584, %v510
    %v613 = vmul.f32 %v588, %v509
    %v614 = vmul.f32 %v588, %v510
    %v615 = vmul.f32 %v592, %v509
    %v616 = vmul.f32 %v592, %v510
    %v617 = vadd.f32 %v491, %v601
    %v618 = vadd.f32 %v492, %v602
    %v619 = vadd.f32 %v493, %v603
    %v620 = vadd.f32 %v494, %v604
    %v621 = vadd.f32 %v495, %v605
    %v622 = vadd.f32 %v496, %v606
    %v623 = vadd.f32 %v497, %v607
    %v624 = vadd.f32 %v498, %v608
    %v625 = vadd.f32 %v499, %v609
    %v626 = vadd.f32 %v500, %v610
    %v627 = vadd.f32 %v501, %v611
    %v628 = vadd.f32 %v502, %v612
    %v629 = vadd.f32 %v503, %v613
    %v630 = vadd.f32 %v504, %v614
    %v631 = vadd.f32 %v505, %v615
    %v632 = vadd.f32 %v506, %v616
    %v633 = vld [vmem:[#allocation2 + $0x20] sm:$0xff]
    %s634 = scalar_lea.vmem [#allocation4], 64
    %v635 = vld [vmem:[%s634] sm:$0xff]
    %v636 = vld [vmem:[%s634 + $0x8] sm:$0xf]
    %v638 = vcombine.high %v633, %v633
    %v640 = vunpack.c.l.s4 1966171168
    %v641 = vunpack.c.0.s8 %v640
    %v642 = vlaneseq
    %v643 = vshrl.u32 %v642, 7
    %v644 = vsub.s32 %v641, %v643
    %v645 = vrot.slane %v633, %v644
    %v647 = vunpack.c.l.s4 1966171168
    %v648 = vunpack.c.0.s8 %v647
    %v649 = vlaneseq
    %v650 = vshrl.u32 %v649, 7
    %v651 = vsub.s32 %v648, %v650
    %v652 = vrot.slane %v638, %v651
    %v653 = vcombine.high %v645, %v645
    %v654 = vcombine.high %v652, %v652
    %v656 = vunpack.c.l.s4 1966171168
    %v657 = vunpack.c.0.s8 %v656
    %v658 = vlaneseq
    %v659 = vshrl.u32 %v658, 7
    %v660 = vsub.s32 %v657, %v659
    %v661 = vrot.slane %v645, %v660
    %v663 = vunpack.c.l.s4 1966171168
    %v664 = vunpack.c.0.s8 %v663
    %v665 = vlaneseq
    %v666 = vshrl.u32 %v665, 7
    %v667 = vsub.s32 %v664, %v666
    %v668 = vrot.slane %v652, %v667
    %v670 = vunpack.c.l.s4 1966171168
    %v671 = vunpack.c.0.s8 %v670
    %v672 = vlaneseq
    %v673 = vshrl.u32 %v672, 7
    %v674 = vsub.s32 %v671, %v673
    %v675 = vrot.slane %v653, %v674
    %v677 = vunpack.c.l.s4 1966171168
    %v678 = vunpack.c.0.s8 %v677
    %v679 = vlaneseq
    %v680 = vshrl.u32 %v679, 7
    %v681 = vsub.s32 %v678, %v680
    %v682 = vrot.slane %v654, %v681
    %v683 = vcombine.high %v661, %v661
    %v684 = vcombine.high %v668, %v668
    %v685 = vcombine.high %v675, %v675
    %v686 = vcombine.high %v682, %v682
    %v687 = vlaneseq
    %v688 = vshrl.u32 %v687, 7
    %v689 = vsub.s32 0, %v688
    %v690 = vrot.slane %v661, %v689
    %v691 = vlaneseq
    %v692 = vshrl.u32 %v691, 7
    %v693 = vsub.s32 0, %v692
    %v694 = vrot.slane %v675, %v693
    %v695 = vlaneseq
    %v696 = vshrl.u32 %v695, 7
    %v697 = vsub.s32 0, %v696
    %v698 = vrot.slane %v683, %v697
    %v699 = vlaneseq
    %v700 = vshrl.u32 %v699, 7
    %v701 = vsub.s32 0, %v700
    %v702 = vrot.slane %v685, %v701
    %v703 = vlaneseq
    %v704 = vshrl.u32 %v703, 7
    %v705 = vsub.s32 0, %v704
    %v706 = vrot.slane %v668, %v705
    %v707 = vlaneseq
    %v708 = vshrl.u32 %v707, 7
    %v709 = vsub.s32 0, %v708
    %v710 = vrot.slane %v682, %v709
    %v711 = vlaneseq
    %v712 = vshrl.u32 %v711, 7
    %v713 = vsub.s32 0, %v712
    %v714 = vrot.slane %v684, %v713
    %v715 = vlaneseq
    %v716 = vshrl.u32 %v715, 7
    %v717 = vsub.s32 0, %v716
    %v718 = vrot.slane %v686, %v717
    %v727 = vmul.f32 %v690, %v635
    %v728 = vmul.f32 %v690, %v636
    %v729 = vmul.f32 %v694, %v635
    %v730 = vmul.f32 %v694, %v636
    %v731 = vmul.f32 %v698, %v635
    %v732 = vmul.f32 %v698, %v636
    %v733 = vmul.f32 %v702, %v635
    %v734 = vmul.f32 %v702, %v636
    %v735 = vmul.f32 %v706, %v635
    %v736 = vmul.f32 %v706, %v636
    %v737 = vmul.f32 %v710, %v635
    %v738 = vmul.f32 %v710, %v636
    %v739 = vmul.f32 %v714, %v635
    %v740 = vmul.f32 %v714, %v636
    %v741 = vmul.f32 %v718, %v635
    %v742 = vmul.f32 %v718, %v636
    %v743 = vadd.f32 %v617, %v727
    %v744 = vadd.f32 %v618, %v728
    %v745 = vadd.f32 %v619, %v729
    %v746 = vadd.f32 %v620, %v730
    %v747 = vadd.f32 %v621, %v731
    %v748 = vadd.f32 %v622, %v732
    %v749 = vadd.f32 %v623, %v733
    %v750 = vadd.f32 %v624, %v734
    %v751 = vadd.f32 %v625, %v735
    %v752 = vadd.f32 %v626, %v736
    %v753 = vadd.f32 %v627, %v737
    %v754 = vadd.f32 %v628, %v738
    %v755 = vadd.f32 %v629, %v739
    %v756 = vadd.f32 %v630, %v740
    %v757 = vadd.f32 %v631, %v741
    %v758 = vadd.f32 %v632, %v742
    %v759 = vld [vmem:[#allocation2 + $0x28] sm:$0xff]
    %s760 = scalar_lea.vmem [#allocation4], 80
    %v761 = vld [vmem:[%s760] sm:$0xff]
    %v762 = vld [vmem:[%s760 + $0x8] sm:$0xf]
    %v764 = vcombine.high %v759, %v759
    %v766 = vunpack.c.l.s4 1966171168
    %v767 = vunpack.c.0.s8 %v766
    %v768 = vlaneseq
    %v769 = vshrl.u32 %v768, 7
    %v770 = vsub.s32 %v767, %v769
    %v771 = vrot.slane %v759, %v770
    %v773 = vunpack.c.l.s4 1966171168
    %v774 = vunpack.c.0.s8 %v773
    %v775 = vlaneseq
    %v776 = vshrl.u32 %v775, 7
    %v777 = vsub.s32 %v774, %v776
    %v778 = vrot.slane %v764, %v777
    %v779 = vcombine.high %v771, %v771
    %v780 = vcombine.high %v778, %v778
    %v782 = vunpack.c.l.s4 1966171168
    %v783 = vunpack.c.0.s8 %v782
    %v784 = vlaneseq
    %v785 = vshrl.u32 %v784, 7
    %v786 = vsub.s32 %v783, %v785
    %v787 = vrot.slane %v771, %v786
    %v789 = vunpack.c.l.s4 1966171168
    %v790 = vunpack.c.0.s8 %v789
    %v791 = vlaneseq
    %v792 = vshrl.u32 %v791, 7
    %v793 = vsub.s32 %v790, %v792
    %v794 = vrot.slane %v778, %v793
    %v796 = vunpack.c.l.s4 1966171168
    %v797 = vunpack.c.0.s8 %v796
    %v798 = vlaneseq
    %v799 = vshrl.u32 %v798, 7
    %v800 = vsub.s32 %v797, %v799
    %v801 = vrot.slane %v779, %v800
    %v803 = vunpack.c.l.s4 1966171168
    %v804 = vunpack.c.0.s8 %v803
    %v805 = vlaneseq
    %v806 = vshrl.u32 %v805, 7
    %v807 = vsub.s32 %v804, %v806
    %v808 = vrot.slane %v780, %v807
    %v809 = vcombine.high %v787, %v787
    %v810 = vcombine.high %v794, %v794
    %v811 = vcombine.high %v801, %v801
    %v812 = vcombine.high %v808, %v808
    %v813 = vlaneseq
    %v814 = vshrl.u32 %v813, 7
    %v815 = vsub.s32 0, %v814
    %v816 = vrot.slane %v787, %v815
    %v817 = vlaneseq
    %v818 = vshrl.u32 %v817, 7
    %v819 = vsub.s32 0, %v818
    %v820 = vrot.slane %v801, %v819
    %v821 = vlaneseq
    %v822 = vshrl.u32 %v821, 7
    %v823 = vsub.s32 0, %v822
    %v824 = vrot.slane %v809, %v823
    %v825 = vlaneseq
    %v826 = vshrl.u32 %v825, 7
    %v827 = vsub.s32 0, %v826
    %v828 = vrot.slane %v811, %v827
    %v829 = vlaneseq
    %v830 = vshrl.u32 %v829, 7
    %v831 = vsub.s32 0, %v830
    %v832 = vrot.slane %v794, %v831
    %v833 = vlaneseq
    %v834 = vshrl.u32 %v833, 7
    %v835 = vsub.s32 0, %v834
    %v836 = vrot.slane %v808, %v835
    %v837 = vlaneseq
    %v838 = vshrl.u32 %v837, 7
    %v839 = vsub.s32 0, %v838
    %v840 = vrot.slane %v810, %v839
    %v841 = vlaneseq
    %v842 = vshrl.u32 %v841, 7
    %v843 = vsub.s32 0, %v842
    %v844 = vrot.slane %v812, %v843
    %v853 = vmul.f32 %v816, %v761
    %v854 = vmul.f32 %v816, %v762
    %v855 = vmul.f32 %v820, %v761
    %v856 = vmul.f32 %v820, %v762
    %v857 = vmul.f32 %v824, %v761
    %v858 = vmul.f32 %v824, %v762
    %v859 = vmul.f32 %v828, %v761
    %v860 = vmul.f32 %v828, %v762
    %v861 = vmul.f32 %v832, %v761
    %v862 = vmul.f32 %v832, %v762
    %v863 = vmul.f32 %v836, %v761
    %v864 = vmul.f32 %v836, %v762
    %v865 = vmul.f32 %v840, %v761
    %v866 = vmul.f32 %v840, %v762
    %v867 = vmul.f32 %v844, %v761
    %v868 = vmul.f32 %v844, %v762
    %v869 = vadd.f32 %v743, %v853
    %v870 = vadd.f32 %v744, %v854
    %v871 = vadd.f32 %v745, %v855
    %v872 = vadd.f32 %v746, %v856
    %v873 = vadd.f32 %v747, %v857
    %v874 = vadd.f32 %v748, %v858
    %v875 = vadd.f32 %v749, %v859
    %v876 = vadd.f32 %v750, %v860
    %v877 = vadd.f32 %v751, %v861
    %v878 = vadd.f32 %v752, %v862
    %v879 = vadd.f32 %v753, %v863
    %v880 = vadd.f32 %v754, %v864
    %v881 = vadd.f32 %v755, %v865
    %v882 = vadd.f32 %v756, %v866
    %v883 = vadd.f32 %v757, %v867
    %v884 = vadd.f32 %v758, %v868
    %v885 = vld [vmem:[#allocation2 + $0x30] sm:$0xff]
    %s886 = scalar_lea.vmem [#allocation4], 96
    %v887 = vld [vmem:[%s886] sm:$0xff]
    %v888 = vld [vmem:[%s886 + $0x8] sm:$0xf]
    %v890 = vcombine.high %v885, %v885
    %v892 = vunpack.c.l.s4 1966171168
    %v893 = vunpack.c.0.s8 %v892
    %v894 = vlaneseq
    %v895 = vshrl.u32 %v894, 7
    %v896 = vsub.s32 %v893, %v895
    %v897 = vrot.slane %v885, %v896
    %v899 = vunpack.c.l.s4 1966171168
    %v900 = vunpack.c.0.s8 %v899
    %v901 = vlaneseq
    %v902 = vshrl.u32 %v901, 7
    %v903 = vsub.s32 %v900, %v902
    %v904 = vrot.slane %v890, %v903
    %v905 = vcombine.high %v897, %v897
    %v906 = vcombine.high %v904, %v904
    %v908 = vunpack.c.l.s4 1966171168
    %v909 = vunpack.c.0.s8 %v908
    %v910 = vlaneseq
    %v911 = vshrl.u32 %v910, 7
    %v912 = vsub.s32 %v909, %v911
    %v913 = vrot.slane %v897, %v912
    %v915 = vunpack.c.l.s4 1966171168
    %v916 = vunpack.c.0.s8 %v915
    %v917 = vlaneseq
    %v918 = vshrl.u32 %v917, 7
    %v919 = vsub.s32 %v916, %v918
    %v920 = vrot.slane %v904, %v919
    %v922 = vunpack.c.l.s4 1966171168
    %v923 = vunpack.c.0.s8 %v922
    %v924 = vlaneseq
    %v925 = vshrl.u32 %v924, 7
    %v926 = vsub.s32 %v923, %v925
    %v927 = vrot.slane %v905, %v926
    %v929 = vunpack.c.l.s4 1966171168
    %v930 = vunpack.c.0.s8 %v929
    %v931 = vlaneseq
    %v932 = vshrl.u32 %v931, 7
    %v933 = vsub.s32 %v930, %v932
    %v934 = vrot.slane %v906, %v933
    %v935 = vcombine.high %v913, %v913
    %v936 = vcombine.high %v920, %v920
    %v937 = vcombine.high %v927, %v927
    %v938 = vcombine.high %v934, %v934
    %v939 = vlaneseq
    %v940 = vshrl.u32 %v939, 7
    %v941 = vsub.s32 0, %v940
    %v942 = vrot.slane %v913, %v941
    %v943 = vlaneseq
    %v944 = vshrl.u32 %v943, 7
    %v945 = vsub.s32 0, %v944
    %v946 = vrot.slane %v927, %v945
    %v947 = vlaneseq
    %v948 = vshrl.u32 %v947, 7
    %v949 = vsub.s32 0, %v948
    %v950 = vrot.slane %v935, %v949
    %v951 = vlaneseq
    %v952 = vshrl.u32 %v951, 7
    %v953 = vsub.s32 0, %v952
    %v954 = vrot.slane %v937, %v953
    %v955 = vlaneseq
    %v956 = vshrl.u32 %v955, 7
    %v957 = vsub.s32 0, %v956
    %v958 = vrot.slane %v920, %v957
    %v959 = vlaneseq
    %v960 = vshrl.u32 %v959, 7
    %v961 = vsub.s32 0, %v960
    %v962 = vrot.slane %v934, %v961
    %v963 = vlaneseq
    %v964 = vshrl.u32 %v963, 7
    %v965 = vsub.s32 0, %v964
    %v966 = vrot.slane %v936, %v965
    %v967 = vlaneseq
    %v968 = vshrl.u32 %v967, 7
    %v969 = vsub.s32 0, %v968
    %v970 = vrot.slane %v938, %v969
    %v979 = vmul.f32 %v942, %v887
    %v980 = vmul.f32 %v942, %v888
    %v981 = vmul.f32 %v946, %v887
    %v982 = vmul.f32 %v946, %v888
    %v983 = vmul.f32 %v950, %v887
    %v984 = vmul.f32 %v950, %v888
    %v985 = vmul.f32 %v954, %v887
    %v986 = vmul.f32 %v954, %v888
    %v987 = vmul.f32 %v958, %v887
    %v988 = vmul.f32 %v958, %v888
    %v989 = vmul.f32 %v962, %v887
    %v990 = vmul.f32 %v962, %v888
    %v991 = vmul.f32 %v966, %v887
    %v992 = vmul.f32 %v966, %v888
    %v993 = vmul.f32 %v970, %v887
    %v994 = vmul.f32 %v970, %v888
    %v995 = vadd.f32 %v869, %v979
    %v996 = vadd.f32 %v870, %v980
    %v997 = vadd.f32 %v871, %v981
    %v998 = vadd.f32 %v872, %v982
    %v999 = vadd.f32 %v873, %v983
    %v1000 = vadd.f32 %v874, %v984
    %v1001 = vadd.f32 %v875, %v985
    %v1002 = vadd.f32 %v876, %v986
    %v1003 = vadd.f32 %v877, %v987
    %v1004 = vadd.f32 %v878, %v988
    %v1005 = vadd.f32 %v879, %v989
    %v1006 = vadd.f32 %v880, %v990
    %v1007 = vadd.f32 %v881, %v991
    %v1008 = vadd.f32 %v882, %v992
    %v1009 = vadd.f32 %v883, %v993
    %v1010 = vadd.f32 %v884, %v994
    %v1011 = vld [vmem:[#allocation2 + $0x38] sm:$0xff]
    %s1012 = scalar_lea.vmem [#allocation4], 112
    %v1013 = vld [vmem:[%s1012] sm:$0xff]
    %v1014 = vld [vmem:[%s1012 + $0x8] sm:$0xf]
    %v1016 = vcombine.high %v1011, %v1011
    %v1018 = vunpack.c.l.s4 1966171168
    %v1019 = vunpack.c.0.s8 %v1018
    %v1020 = vlaneseq
    %v1021 = vshrl.u32 %v1020, 7
    %v1022 = vsub.s32 %v1019, %v1021
    %v1023 = vrot.slane %v1011, %v1022
    %v1025 = vunpack.c.l.s4 1966171168
    %v1026 = vunpack.c.0.s8 %v1025
    %v1027 = vlaneseq
    %v1028 = vshrl.u32 %v1027, 7
    %v1029 = vsub.s32 %v1026, %v1028
    %v1030 = vrot.slane %v1016, %v1029
    %v1031 = vcombine.high %v1023, %v1023
    %v1032 = vcombine.high %v1030, %v1030
    %v1034 = vunpack.c.l.s4 1966171168
    %v1035 = vunpack.c.0.s8 %v1034
    %v1036 = vlaneseq
    %v1037 = vshrl.u32 %v1036, 7
    %v1038 = vsub.s32 %v1035, %v1037
    %v1039 = vrot.slane %v1023, %v1038
    %v1041 = vunpack.c.l.s4 1966171168
    %v1042 = vunpack.c.0.s8 %v1041
    %v1043 = vlaneseq
    %v1044 = vshrl.u32 %v1043, 7
    %v1045 = vsub.s32 %v1042, %v1044
    %v1046 = vrot.slane %v1030, %v1045
    %v1048 = vunpack.c.l.s4 1966171168
    %v1049 = vunpack.c.0.s8 %v1048
    %v1050 = vlaneseq
    %v1051 = vshrl.u32 %v1050, 7
    %v1052 = vsub.s32 %v1049, %v1051
    %v1053 = vrot.slane %v1031, %v1052
    %v1055 = vunpack.c.l.s4 1966171168
    %v1056 = vunpack.c.0.s8 %v1055
    %v1057 = vlaneseq
    %v1058 = vshrl.u32 %v1057, 7
    %v1059 = vsub.s32 %v1056, %v1058
    %v1060 = vrot.slane %v1032, %v1059
    %v1061 = vcombine.high %v1039, %v1039
    %v1062 = vcombine.high %v1046, %v1046
    %v1063 = vcombine.high %v1053, %v1053
    %v1064 = vcombine.high %v1060, %v1060
    %v1065 = vlaneseq
    %v1066 = vshrl.u32 %v1065, 7
    %v1067 = vsub.s32 0, %v1066
    %v1068 = vrot.slane %v1039, %v1067
    %v1069 = vlaneseq
    %v1070 = vshrl.u32 %v1069, 7
    %v1071 = vsub.s32 0, %v1070
    %v1072 = vrot.slane %v1053, %v1071
    %v1073 = vlaneseq
    %v1074 = vshrl.u32 %v1073, 7
    %v1075 = vsub.s32 0, %v1074
    %v1076 = vrot.slane %v1061, %v1075
    %v1077 = vlaneseq
    %v1078 = vshrl.u32 %v1077, 7
    %v1079 = vsub.s32 0, %v1078
    %v1080 = vrot.slane %v1063, %v1079
    %v1081 = vlaneseq
    %v1082 = vshrl.u32 %v1081, 7
    %v1083 = vsub.s32 0, %v1082
    %v1084 = vrot.slane %v1046, %v1083
    %v1085 = vlaneseq
    %v1086 = vshrl.u32 %v1085, 7
    %v1087 = vsub.s32 0, %v1086
    %v1088 = vrot.slane %v1060, %v1087
    %v1089 = vlaneseq
    %v1090 = vshrl.u32 %v1089, 7
    %v1091 = vsub.s32 0, %v1090
    %v1092 = vrot.slane %v1062, %v1091
    %v1093 = vlaneseq
    %v1094 = vshrl.u32 %v1093, 7
    %v1095 = vsub.s32 0, %v1094
    %v1096 = vrot.slane %v1064, %v1095
    %v1105 = vmul.f32 %v1068, %v1013
    %v1106 = vmul.f32 %v1068, %v1014
    %v1107 = vmul.f32 %v1072, %v1013
    %v1108 = vmul.f32 %v1072, %v1014
    %v1109 = vmul.f32 %v1076, %v1013
    %v1110 = vmul.f32 %v1076, %v1014
    %v1111 = vmul.f32 %v1080, %v1013
    %v1112 = vmul.f32 %v1080, %v1014
    %v1113 = vmul.f32 %v1084, %v1013
    %v1114 = vmul.f32 %v1084, %v1014
    %v1115 = vmul.f32 %v1088, %v1013
    %v1116 = vmul.f32 %v1088, %v1014
    %v1117 = vmul.f32 %v1092, %v1013
    %v1118 = vmul.f32 %v1092, %v1014
    %v1119 = vmul.f32 %v1096, %v1013
    %v1120 = vmul.f32 %v1096, %v1014
    %v1121 = vadd.f32 %v995, %v1105
    %v1122 = vadd.f32 %v996, %v1106
    %v1123 = vadd.f32 %v997, %v1107
    %v1124 = vadd.f32 %v998, %v1108
    %v1125 = vadd.f32 %v999, %v1109
    %v1126 = vadd.f32 %v1000, %v1110
    %v1127 = vadd.f32 %v1001, %v1111
    %v1128 = vadd.f32 %v1002, %v1112
    %v1129 = vadd.f32 %v1003, %v1113
    %v1130 = vadd.f32 %v1004, %v1114
    %v1131 = vadd.f32 %v1005, %v1115
    %v1132 = vadd.f32 %v1006, %v1116
    %v1133 = vadd.f32 %v1007, %v1117
    %v1134 = vadd.f32 %v1008, %v1118
    %v1135 = vadd.f32 %v1009, %v1119
    %v1136 = vadd.f32 %v1010, %v1120
    %v1137 = vld [vmem:[#allocation2 + $0x40] sm:$0xff]
    %s1138 = scalar_lea.vmem [#allocation4], 128
    %v1139 = vld [vmem:[%s1138] sm:$0xff]
    %v1140 = vld [vmem:[%s1138 + $0x8] sm:$0xf]
    %v1142 = vcombine.high %v1137, %v1137
    %v1144 = vunpack.c.l.s4 1966171168
    %v1145 = vunpack.c.0.s8 %v1144
    %v1146 = vlaneseq
    %v1147 = vshrl.u32 %v1146, 7
    %v1148 = vsub.s32 %v1145, %v1147
    %v1149 = vrot.slane %v1137, %v1148
    %v1151 = vunpack.c.l.s4 1966171168
    %v1152 = vunpack.c.0.s8 %v1151
    %v1153 = vlaneseq
    %v1154 = vshrl.u32 %v1153, 7
    %v1155 = vsub.s32 %v1152, %v1154
    %v1156 = vrot.slane %v1142, %v1155
    %v1157 = vcombine.high %v1149, %v1149
    %v1158 = vcombine.high %v1156, %v1156
    %v1160 = vunpack.c.l.s4 1966171168
    %v1161 = vunpack.c.0.s8 %v1160
    %v1162 = vlaneseq
    %v1163 = vshrl.u32 %v1162, 7
    %v1164 = vsub.s32 %v1161, %v1163
    %v1165 = vrot.slane %v1149, %v1164
    %v1167 = vunpack.c.l.s4 1966171168
    %v1168 = vunpack.c.0.s8 %v1167
    %v1169 = vlaneseq
    %v1170 = vshrl.u32 %v1169, 7
    %v1171 = vsub.s32 %v1168, %v1170
    %v1172 = vrot.slane %v1156, %v1171
    %v1174 = vunpack.c.l.s4 1966171168
    %v1175 = vunpack.c.0.s8 %v1174
    %v1176 = vlaneseq
    %v1177 = vshrl.u32 %v1176, 7
    %v1178 = vsub.s32 %v1175, %v1177
    %v1179 = vrot.slane %v1157, %v1178
    %v1181 = vunpack.c.l.s4 1966171168
    %v1182 = vunpack.c.0.s8 %v1181
    %v1183 = vlaneseq
    %v1184 = vshrl.u32 %v1183, 7
    %v1185 = vsub.s32 %v1182, %v1184
    %v1186 = vrot.slane %v1158, %v1185
    %v1187 = vcombine.high %v1165, %v1165
    %v1188 = vcombine.high %v1172, %v1172
    %v1189 = vcombine.high %v1179, %v1179
    %v1190 = vcombine.high %v1186, %v1186
    %v1191 = vlaneseq
    %v1192 = vshrl.u32 %v1191, 7
    %v1193 = vsub.s32 0, %v1192
    %v1194 = vrot.slane %v1165, %v1193
    %v1195 = vlaneseq
    %v1196 = vshrl.u32 %v1195, 7
    %v1197 = vsub.s32 0, %v1196
    %v1198 = vrot.slane %v1179, %v1197
    %v1199 = vlaneseq
    %v1200 = vshrl.u32 %v1199, 7
    %v1201 = vsub.s32 0, %v1200
    %v1202 = vrot.slane %v1187, %v1201
    %v1203 = vlaneseq
    %v1204 = vshrl.u32 %v1203, 7
    %v1205 = vsub.s32 0, %v1204
    %v1206 = vrot.slane %v1189, %v1205
    %v1207 = vlaneseq
    %v1208 = vshrl.u32 %v1207, 7
    %v1209 = vsub.s32 0, %v1208
    %v1210 = vrot.slane %v1172, %v1209
    %v1211 = vlaneseq
    %v1212 = vshrl.u32 %v1211, 7
    %v1213 = vsub.s32 0, %v1212
    %v1214 = vrot.slane %v1186, %v1213
    %v1215 = vlaneseq
    %v1216 = vshrl.u32 %v1215, 7
    %v1217 = vsub.s32 0, %v1216
    %v1218 = vrot.slane %v1188, %v1217
    %v1219 = vlaneseq
    %v1220 = vshrl.u32 %v1219, 7
    %v1221 = vsub.s32 0, %v1220
    %v1222 = vrot.slane %v1190, %v1221
    %v1231 = vmul.f32 %v1194, %v1139
    %v1232 = vmul.f32 %v1194, %v1140
    %v1233 = vmul.f32 %v1198, %v1139
    %v1234 = vmul.f32 %v1198, %v1140
    %v1235 = vmul.f32 %v1202, %v1139
    %v1236 = vmul.f32 %v1202, %v1140
    %v1237 = vmul.f32 %v1206, %v1139
    %v1238 = vmul.f32 %v1206, %v1140
    %v1239 = vmul.f32 %v1210, %v1139
    %v1240 = vmul.f32 %v1210, %v1140
    %v1241 = vmul.f32 %v1214, %v1139
    %v1242 = vmul.f32 %v1214, %v1140
    %v1243 = vmul.f32 %v1218, %v1139
    %v1244 = vmul.f32 %v1218, %v1140
    %v1245 = vmul.f32 %v1222, %v1139
    %v1246 = vmul.f32 %v1222, %v1140
    %v1247 = vadd.f32 %v1121, %v1231
    %v1248 = vadd.f32 %v1122, %v1232
    %v1249 = vadd.f32 %v1123, %v1233
    %v1250 = vadd.f32 %v1124, %v1234
    %v1251 = vadd.f32 %v1125, %v1235
    %v1252 = vadd.f32 %v1126, %v1236
    %v1253 = vadd.f32 %v1127, %v1237
    %v1254 = vadd.f32 %v1128, %v1238
    %v1255 = vadd.f32 %v1129, %v1239
    %v1256 = vadd.f32 %v1130, %v1240
    %v1257 = vadd.f32 %v1131, %v1241
    %v1258 = vadd.f32 %v1132, %v1242
    %v1259 = vadd.f32 %v1133, %v1243
    %v1260 = vadd.f32 %v1134, %v1244
    %v1261 = vadd.f32 %v1135, %v1245
    %v1262 = vadd.f32 %v1136, %v1246
    %v1263 = vld [vmem:[#allocation2 + $0x48] sm:$0xff]
    %s1264 = scalar_lea.vmem [#allocation4], 144
    %v1265 = vld [vmem:[%s1264] sm:$0xff]
    %v1266 = vld [vmem:[%s1264 + $0x8] sm:$0xf]
    %v1268 = vcombine.high %v1263, %v1263
    %v1270 = vunpack.c.l.s4 1966171168
    %v1271 = vunpack.c.0.s8 %v1270
    %v1272 = vlaneseq
    %v1273 = vshrl.u32 %v1272, 7
    %v1274 = vsub.s32 %v1271, %v1273
    %v1275 = vrot.slane %v1263, %v1274
    %v1277 = vunpack.c.l.s4 1966171168
    %v1278 = vunpack.c.0.s8 %v1277
    %v1279 = vlaneseq
    %v1280 = vshrl.u32 %v1279, 7
    %v1281 = vsub.s32 %v1278, %v1280
    %v1282 = vrot.slane %v1268, %v1281
    %v1283 = vcombine.high %v1275, %v1275
    %v1284 = vcombine.high %v1282, %v1282
    %v1286 = vunpack.c.l.s4 1966171168
    %v1287 = vunpack.c.0.s8 %v1286
    %v1288 = vlaneseq
    %v1289 = vshrl.u32 %v1288, 7
    %v1290 = vsub.s32 %v1287, %v1289
    %v1291 = vrot.slane %v1275, %v1290
    %v1293 = vunpack.c.l.s4 1966171168
    %v1294 = vunpack.c.0.s8 %v1293
    %v1295 = vlaneseq
    %v1296 = vshrl.u32 %v1295, 7
    %v1297 = vsub.s32 %v1294, %v1296
    %v1298 = vrot.slane %v1282, %v1297
    %v1300 = vunpack.c.l.s4 1966171168
    %v1301 = vunpack.c.0.s8 %v1300
    %v1302 = vlaneseq
    %v1303 = vshrl.u32 %v1302, 7
    %v1304 = vsub.s32 %v1301, %v1303
    %v1305 = vrot.slane %v1283, %v1304
    %v1307 = vunpack.c.l.s4 1966171168
    %v1308 = vunpack.c.0.s8 %v1307
    %v1309 = vlaneseq
    %v1310 = vshrl.u32 %v1309, 7
    %v1311 = vsub.s32 %v1308, %v1310
    %v1312 = vrot.slane %v1284, %v1311
    %v1313 = vcombine.high %v1291, %v1291
    %v1314 = vcombine.high %v1298, %v1298
    %v1315 = vcombine.high %v1305, %v1305
    %v1316 = vcombine.high %v1312, %v1312
    %v1317 = vlaneseq
    %v1318 = vshrl.u32 %v1317, 7
    %v1319 = vsub.s32 0, %v1318
    %v1320 = vrot.slane %v1291, %v1319
    %v1321 = vlaneseq
    %v1322 = vshrl.u32 %v1321, 7
    %v1323 = vsub.s32 0, %v1322
    %v1324 = vrot.slane %v1305, %v1323
    %v1325 = vlaneseq
    %v1326 = vshrl.u32 %v1325, 7
    %v1327 = vsub.s32 0, %v1326
    %v1328 = vrot.slane %v1313, %v1327
    %v1329 = vlaneseq
    %v1330 = vshrl.u32 %v1329, 7
    %v1331 = vsub.s32 0, %v1330
    %v1332 = vrot.slane %v1315, %v1331
    %v1333 = vlaneseq
    %v1334 = vshrl.u32 %v1333, 7
    %v1335 = vsub.s32 0, %v1334
    %v1336 = vrot.slane %v1298, %v1335
    %v1337 = vlaneseq
    %v1338 = vshrl.u32 %v1337, 7
    %v1339 = vsub.s32 0, %v1338
    %v1340 = vrot.slane %v1312, %v1339
    %v1341 = vlaneseq
    %v1342 = vshrl.u32 %v1341, 7
    %v1343 = vsub.s32 0, %v1342
    %v1344 = vrot.slane %v1314, %v1343
    %v1345 = vlaneseq
    %v1346 = vshrl.u32 %v1345, 7
    %v1347 = vsub.s32 0, %v1346
    %v1348 = vrot.slane %v1316, %v1347
    %v1357 = vmul.f32 %v1320, %v1265
    %v1358 = vmul.f32 %v1320, %v1266
    %v1359 = vmul.f32 %v1324, %v1265
    %v1360 = vmul.f32 %v1324, %v1266
    %v1361 = vmul.f32 %v1328, %v1265
    %v1362 = vmul.f32 %v1328, %v1266
    %v1363 = vmul.f32 %v1332, %v1265
    %v1364 = vmul.f32 %v1332, %v1266
    %v1365 = vmul.f32 %v1336, %v1265
    %v1366 = vmul.f32 %v1336, %v1266
    %v1367 = vmul.f32 %v1340, %v1265
    %v1368 = vmul.f32 %v1340, %v1266
    %v1369 = vmul.f32 %v1344, %v1265
    %v1370 = vmul.f32 %v1344, %v1266
    %v1371 = vmul.f32 %v1348, %v1265
    %v1372 = vmul.f32 %v1348, %v1266
    %v1373 = vadd.f32 %v1247, %v1357
    %v1374 = vadd.f32 %v1248, %v1358
    %v1375 = vadd.f32 %v1249, %v1359
    %v1376 = vadd.f32 %v1250, %v1360
    %v1377 = vadd.f32 %v1251, %v1361
    %v1378 = vadd.f32 %v1252, %v1362
    %v1379 = vadd.f32 %v1253, %v1363
    %v1380 = vadd.f32 %v1254, %v1364
    %v1381 = vadd.f32 %v1255, %v1365
    %v1382 = vadd.f32 %v1256, %v1366
    %v1383 = vadd.f32 %v1257, %v1367
    %v1384 = vadd.f32 %v1258, %v1368
    %v1385 = vadd.f32 %v1259, %v1369
    %v1386 = vadd.f32 %v1260, %v1370
    %v1387 = vadd.f32 %v1261, %v1371
    %v1388 = vadd.f32 %v1262, %v1372
    %v1389 = vld [vmem:[#allocation2 + $0x50] sm:$0xff]
    %s1390 = scalar_lea.vmem [#allocation4], 160
    %v1391 = vld [vmem:[%s1390] sm:$0xff]
    %v1392 = vld [vmem:[%s1390 + $0x8] sm:$0xf]
    %v1394 = vcombine.high %v1389, %v1389
    %v1396 = vunpack.c.l.s4 1966171168
    %v1397 = vunpack.c.0.s8 %v1396
    %v1398 = vlaneseq
    %v1399 = vshrl.u32 %v1398, 7
    %v1400 = vsub.s32 %v1397, %v1399
    %v1401 = vrot.slane %v1389, %v1400
    %v1403 = vunpack.c.l.s4 1966171168
    %v1404 = vunpack.c.0.s8 %v1403
    %v1405 = vlaneseq
    %v1406 = vshrl.u32 %v1405, 7
    %v1407 = vsub.s32 %v1404, %v1406
    %v1408 = vrot.slane %v1394, %v1407
    %v1409 = vcombine.high %v1401, %v1401
    %v1410 = vcombine.high %v1408, %v1408
    %v1412 = vunpack.c.l.s4 1966171168
    %v1413 = vunpack.c.0.s8 %v1412
    %v1414 = vlaneseq
    %v1415 = vshrl.u32 %v1414, 7
    %v1416 = vsub.s32 %v1413, %v1415
    %v1417 = vrot.slane %v1401, %v1416
    %v1419 = vunpack.c.l.s4 1966171168
    %v1420 = vunpack.c.0.s8 %v1419
    %v1421 = vlaneseq
    %v1422 = vshrl.u32 %v1421, 7
    %v1423 = vsub.s32 %v1420, %v1422
    %v1424 = vrot.slane %v1408, %v1423
    %v1426 = vunpack.c.l.s4 1966171168
    %v1427 = vunpack.c.0.s8 %v1426
    %v1428 = vlaneseq
    %v1429 = vshrl.u32 %v1428, 7
    %v1430 = vsub.s32 %v1427, %v1429
    %v1431 = vrot.slane %v1409, %v1430
    %v1433 = vunpack.c.l.s4 1966171168
    %v1434 = vunpack.c.0.s8 %v1433
    %v1435 = vlaneseq
    %v1436 = vshrl.u32 %v1435, 7
    %v1437 = vsub.s32 %v1434, %v1436
    %v1438 = vrot.slane %v1410, %v1437
    %v1439 = vcombine.high %v1417, %v1417
    %v1440 = vcombine.high %v1424, %v1424
    %v1441 = vcombine.high %v1431, %v1431
    %v1442 = vcombine.high %v1438, %v1438
    %v1443 = vlaneseq
    %v1444 = vshrl.u32 %v1443, 7
    %v1445 = vsub.s32 0, %v1444
    %v1446 = vrot.slane %v1417, %v1445
    %v1447 = vlaneseq
    %v1448 = vshrl.u32 %v1447, 7
    %v1449 = vsub.s32 0, %v1448
    %v1450 = vrot.slane %v1431, %v1449
    %v1451 = vlaneseq
    %v1452 = vshrl.u32 %v1451, 7
    %v1453 = vsub.s32 0, %v1452
    %v1454 = vrot.slane %v1439, %v1453
    %v1455 = vlaneseq
    %v1456 = vshrl.u32 %v1455, 7
    %v1457 = vsub.s32 0, %v1456
    %v1458 = vrot.slane %v1441, %v1457
    %v1459 = vlaneseq
    %v1460 = vshrl.u32 %v1459, 7
    %v1461 = vsub.s32 0, %v1460
    %v1462 = vrot.slane %v1424, %v1461
    %v1463 = vlaneseq
    %v1464 = vshrl.u32 %v1463, 7
    %v1465 = vsub.s32 0, %v1464
    %v1466 = vrot.slane %v1438, %v1465
    %v1467 = vlaneseq
    %v1468 = vshrl.u32 %v1467, 7
    %v1469 = vsub.s32 0, %v1468
    %v1470 = vrot.slane %v1440, %v1469
    %v1471 = vlaneseq
    %v1472 = vshrl.u32 %v1471, 7
    %v1473 = vsub.s32 0, %v1472
    %v1474 = vrot.slane %v1442, %v1473
    %v1483 = vmul.f32 %v1446, %v1391
    %v1484 = vmul.f32 %v1446, %v1392
    %v1485 = vmul.f32 %v1450, %v1391
    %v1486 = vmul.f32 %v1450, %v1392
    %v1487 = vmul.f32 %v1454, %v1391
    %v1488 = vmul.f32 %v1454, %v1392
    %v1489 = vmul.f32 %v1458, %v1391
    %v1490 = vmul.f32 %v1458, %v1392
    %v1491 = vmul.f32 %v1462, %v1391
    %v1492 = vmul.f32 %v1462, %v1392
    %v1493 = vmul.f32 %v1466, %v1391
    %v1494 = vmul.f32 %v1466, %v1392
    %v1495 = vmul.f32 %v1470, %v1391
    %v1496 = vmul.f32 %v1470, %v1392
    %v1497 = vmul.f32 %v1474, %v1391
    %v1498 = vmul.f32 %v1474, %v1392
    %v1499 = vadd.f32 %v1373, %v1483
    %v1500 = vadd.f32 %v1374, %v1484
    %v1501 = vadd.f32 %v1375, %v1485
    %v1502 = vadd.f32 %v1376, %v1486
    %v1503 = vadd.f32 %v1377, %v1487
    %v1504 = vadd.f32 %v1378, %v1488
    %v1505 = vadd.f32 %v1379, %v1489
    %v1506 = vadd.f32 %v1380, %v1490
    %v1507 = vadd.f32 %v1381, %v1491
    %v1508 = vadd.f32 %v1382, %v1492
    %v1509 = vadd.f32 %v1383, %v1493
    %v1510 = vadd.f32 %v1384, %v1494
    %v1511 = vadd.f32 %v1385, %v1495
    %v1512 = vadd.f32 %v1386, %v1496
    %v1513 = vadd.f32 %v1387, %v1497
    %v1514 = vadd.f32 %v1388, %v1498
    %v1515 = vld [vmem:[#allocation2 + $0x58] sm:$0xff]
    %s1516 = scalar_lea.vmem [#allocation4], 176
    %v1517 = vld [vmem:[%s1516] sm:$0xff]
    %v1518 = vld [vmem:[%s1516 + $0x8] sm:$0xf]
    %v1520 = vcombine.high %v1515, %v1515
    %v1522 = vunpack.c.l.s4 1966171168
    %v1523 = vunpack.c.0.s8 %v1522
    %v1524 = vlaneseq
    %v1525 = vshrl.u32 %v1524, 7
    %v1526 = vsub.s32 %v1523, %v1525
    %v1527 = vrot.slane %v1515, %v1526
    %v1529 = vunpack.c.l.s4 1966171168
    %v1530 = vunpack.c.0.s8 %v1529
    %v1531 = vlaneseq
    %v1532 = vshrl.u32 %v1531, 7
    %v1533 = vsub.s32 %v1530, %v1532
    %v1534 = vrot.slane %v1520, %v1533
    %v1535 = vcombine.high %v1527, %v1527
    %v1536 = vcombine.high %v1534, %v1534
    %v1538 = vunpack.c.l.s4 1966171168
    %v1539 = vunpack.c.0.s8 %v1538
    %v1540 = vlaneseq
    %v1541 = vshrl.u32 %v1540, 7
    %v1542 = vsub.s32 %v1539, %v1541
    %v1543 = vrot.slane %v1527, %v1542
    %v1545 = vunpack.c.l.s4 1966171168
    %v1546 = vunpack.c.0.s8 %v1545
    %v1547 = vlaneseq
    %v1548 = vshrl.u32 %v1547, 7
    %v1549 = vsub.s32 %v1546, %v1548
    %v1550 = vrot.slane %v1534, %v1549
    %v1552 = vunpack.c.l.s4 1966171168
    %v1553 = vunpack.c.0.s8 %v1552
    %v1554 = vlaneseq
    %v1555 = vshrl.u32 %v1554, 7
    %v1556 = vsub.s32 %v1553, %v1555
    %v1557 = vrot.slane %v1535, %v1556
    %v1559 = vunpack.c.l.s4 1966171168
    %v1560 = vunpack.c.0.s8 %v1559
    %v1561 = vlaneseq
    %v1562 = vshrl.u32 %v1561, 7
    %v1563 = vsub.s32 %v1560, %v1562
    %v1564 = vrot.slane %v1536, %v1563
    %v1565 = vcombine.high %v1543, %v1543
    %v1566 = vcombine.high %v1550, %v1550
    %v1567 = vcombine.high %v1557, %v1557
    %v1568 = vcombine.high %v1564, %v1564
    %v1569 = vlaneseq
    %v1570 = vshrl.u32 %v1569, 7
    %v1571 = vsub.s32 0, %v1570
    %v1572 = vrot.slane %v1543, %v1571
    %v1573 = vlaneseq
    %v1574 = vshrl.u32 %v1573, 7
    %v1575 = vsub.s32 0, %v1574
    %v1576 = vrot.slane %v1557, %v1575
    %v1577 = vlaneseq
    %v1578 = vshrl.u32 %v1577, 7
    %v1579 = vsub.s32 0, %v1578
    %v1580 = vrot.slane %v1565, %v1579
    %v1581 = vlaneseq
    %v1582 = vshrl.u32 %v1581, 7
    %v1583 = vsub.s32 0, %v1582
    %v1584 = vrot.slane %v1567, %v1583
    %v1585 = vlaneseq
    %v1586 = vshrl.u32 %v1585, 7
    %v1587 = vsub.s32 0, %v1586
    %v1588 = vrot.slane %v1550, %v1587
    %v1589 = vlaneseq
    %v1590 = vshrl.u32 %v1589, 7
    %v1591 = vsub.s32 0, %v1590
    %v1592 = vrot.slane %v1564, %v1591
    %v1593 = vlaneseq
    %v1594 = vshrl.u32 %v1593, 7
    %v1595 = vsub.s32 0, %v1594
    %v1596 = vrot.slane %v1566, %v1595
    %v1597 = vlaneseq
    %v1598 = vshrl.u32 %v1597, 7
    %v1599 = vsub.s32 0, %v1598
    %v1600 = vrot.slane %v1568, %v1599
    %v1609 = vmul.f32 %v1572, %v1517
    %v1610 = vmul.f32 %v1572, %v1518
    %v1611 = vmul.f32 %v1576, %v1517
    %v1612 = vmul.f32 %v1576, %v1518
    %v1613 = vmul.f32 %v1580, %v1517
    %v1614 = vmul.f32 %v1580, %v1518
    %v1615 = vmul.f32 %v1584, %v1517
    %v1616 = vmul.f32 %v1584, %v1518
    %v1617 = vmul.f32 %v1588, %v1517
    %v1618 = vmul.f32 %v1588, %v1518
    %v1619 = vmul.f32 %v1592, %v1517
    %v1620 = vmul.f32 %v1592, %v1518
    %v1621 = vmul.f32 %v1596, %v1517
    %v1622 = vmul.f32 %v1596, %v1518
    %v1623 = vmul.f32 %v1600, %v1517
    %v1624 = vmul.f32 %v1600, %v1518
    %v1625 = vadd.f32 %v1499, %v1609
    %v1626 = vadd.f32 %v1500, %v1610
    %v1627 = vadd.f32 %v1501, %v1611
    %v1628 = vadd.f32 %v1502, %v1612
    %v1629 = vadd.f32 %v1503, %v1613
    %v1630 = vadd.f32 %v1504, %v1614
    %v1631 = vadd.f32 %v1505, %v1615
    %v1632 = vadd.f32 %v1506, %v1616
    %v1633 = vadd.f32 %v1507, %v1617
    %v1634 = vadd.f32 %v1508, %v1618
    %v1635 = vadd.f32 %v1509, %v1619
    %v1636 = vadd.f32 %v1510, %v1620
    %v1637 = vadd.f32 %v1511, %v1621
    %v1638 = vadd.f32 %v1512, %v1622
    %v1639 = vadd.f32 %v1513, %v1623
    %v1640 = vadd.f32 %v1514, %v1624
    %1641 = vst [vmem:[%s2] sm:$0xff] %v1625
    %1642 = vst [vmem:[%s2 + $0x8] sm:$0xf] %v1626
    %1643 = vst [vmem:[%s2 + $0x10] sm:$0xff] %v1627
    %1644 = vst [vmem:[%s2 + $0x18] sm:$0xf] %v1628
    %1645 = vst [vmem:[%s2 + $0x20] sm:$0xff] %v1629
    %1646 = vst [vmem:[%s2 + $0x28] sm:$0xf] %v1630
    %1647 = vst [vmem:[%s2 + $0x30] sm:$0xff] %v1631
    %1648 = vst [vmem:[%s2 + $0x38] sm:$0xf] %v1632
    %1649 = vst [vmem:[%s2 + $0x40] sm:$0xff] %v1633
    %1650 = vst [vmem:[%s2 + $0x48] sm:$0xf] %v1634
    %1651 = vst [vmem:[%s2 + $0x50] sm:$0xff] %v1635
    %1652 = vst [vmem:[%s2 + $0x58] sm:$0xf] %v1636
    %1653 = vst [vmem:[%s2 + $0x60] sm:$0xff] %v1637
    %1654 = vst [vmem:[%s2 + $0x68] sm:$0xf] %v1638
    %1655 = vst [vmem:[%s2 + $0x70] sm:$0xff] %v1639
    %1656 = vst [vmem:[%s2 + $0x78] sm:$0xf] %v1640
    // Predicated region
    $region18: #{tpu_custom_call.1} parent=1 // pred_check
      _
    $region19: #{tpu_custom_call.1} parent=1 // pred_check_branch
      %1658 = sbr.rel (0) target = $region21
    $region20: #{tpu_custom_call.1} parent=1 // pred_region
      _
    $region21: #{tpu_custom_call.1} parent=1 // pred_fallthru
      _
    // Predicated region
    $region22: #{tpu_custom_call.1} parent=1 // pred_check
      _
    $region23: #{tpu_custom_call.1} parent=1 // pred_check_branch
      %1660 = sbr.rel (0) target = $region25
    $region24: #{tpu_custom_call.1} parent=1 // pred_region
      _
    $region25: #{tpu_custom_call.1} parent=1 // pred_fallthru
      _
    %1661 = vsyncpa [#allocation3], 1
    %1662 = vsyncpa [#allocation5], 1

</llo_original>
